<compile_context>
chip_gen: v5e
topology: v5e:2x2
jax: 0.10.0
libtpu: 0.0.40
codegen_flags: <defaults>
</compile_context>

<pallas_src>
import functools

import jax
import jax.numpy as jnp
from jax import lax
from jax.experimental import pallas as pl
from jax.experimental.pallas import tpu as pltpu


# ----------------------------- fused Pallas kernel ------------------------------


def _fused_lstm_fc_kernel(*refs, num_layers, seq_len, batch_pad, hidden):
    """Fused multi-layer LSTM + FC on the last timestep.

    refs layout:
      inputs : x_ref (T*Bp, D0) bf16,
               per layer l: w_ih_l (D_in_l, 4H) bf16, w_hh_l (H, 4H) bf16, b_l (1, 4H) f32,
               fc_w (H, O) bf16, fc_b (1, O) f32
      outputs: out_ref (Bp, O) f32
      scratch: gx_scr  (T*Bp, 4H) f32  -- hoisted fused-gate input projections (reused per layer)
               hseq_scr (T*Bp, H) f32  -- previous layer's hidden sequence (VMEM only)
    Gate order along the 4H axis: [i, f, o, g] (sigmoid gates lane-contiguous).
    """
    x_ref = refs[0]
    idx = 1
    layer_refs = []
    for _ in range(num_layers):
        layer_refs.append((refs[idx], refs[idx + 1], refs[idx + 2]))
        idx += 3
    fc_w_ref, fc_b_ref, out_ref = refs[idx], refs[idx + 1], refs[idx + 2]
    gx_scr, hseq_scr = refs[idx + 3], refs[idx + 4]

    T, Bp, H = seq_len, batch_pad, hidden
    unroll = True if T <= 8 else 4

    h_last = None
    for l, (w_ih_ref, w_hh_ref, b_ref) in enumerate(layer_refs):
        is_last_layer = l == num_layers - 1

        # ---- hoisted input projection: ONE lane-dense matmul over all timesteps ----
        if l == 0:
            x_in = x_ref[...]                              # (T*Bp, D0) bf16
        else:
            x_in = hseq_scr[...].astype(jnp.bfloat16)      # (T*Bp, H)  bf16
        gx_scr[...] = (
            jnp.dot(x_in, w_ih_ref[...], preferred_element_type=jnp.float32)
            + b_ref[...]
        )

        # Recurrent weights loaded once per layer (held across the whole time loop).
        w_hh = w_hh_ref[...]                               # (H, 4H) bf16
        store_seq = not is_last_layer

        # ---- serial recurrence: h/c live in vregs (loop carries), no VMEM ld/st ----
        def step(t, carry, _w_hh=w_hh, _store=store_seq):
            h, c = carry
            row = pl.multiple_of(t * Bp, 8)
            gates = gx_scr[pl.ds(row, Bp), :] + jnp.dot(
                h.astype(jnp.bfloat16), _w_hh, preferred_element_type=jnp.float32
            )                                              # (Bp, 4H) f32
            s = jax.nn.sigmoid(gates[:, : 3 * H])          # [i, f, o] in one EUP pass
            g = jnp.tanh(gates[:, 3 * H:])                 # candidate cell
            i_g = s[:, :H]
            f_g = s[:, H:2 * H]
            o_g = s[:, 2 * H:]
            c_new = f_g * c + i_g * g
            h_new = o_g * jnp.tanh(c_new)
            if _store:
                hseq_scr[pl.ds(row, Bp), :] = h_new
            return h_new, c_new

        zeros = jnp.zeros((Bp, H), jnp.float32)
        h_last, _ = lax.fori_loop(0, T, step, (zeros, zeros), unroll=unroll)

    # ---- FC on the final hidden state of the last layer ----
    out_ref[...] = (
        jnp.dot(h_last.astype(jnp.bfloat16), fc_w_ref[...],
                preferred_element_type=jnp.float32)
        + fc_b_ref[...]
    )


# ------------------------------ JAX wrapper --------------------------------


def _vmem_spec():
    return pl.BlockSpec(memory_space=pltpu.MemorySpace.VMEM)


def init_params(key, input_size, hidden_size, output_size, num_layers):
    """PyTorch-style init; gate weights fused along the last axis, order [i, f, o, g].

    w_ih[l]: (D_in_l, 4H), w_hh[l]: (H, 4H), b[l]: (1, 4H) (= b_ih + b_hh)
    fc_w: (H, O), fc_b: (1, O).
    (To import PyTorch weights: transpose and permute the [i,f,g,o] blocks to [i,f,o,g].)
    """
    params = {"layers": []}
    H = hidden_size
    bound = 1.0 / hidden_size ** 0.5
    for layer in range(num_layers):
        d_in = input_size if layer == 0 else hidden_size
        key, k1, k2, k3, k4 = jax.random.split(key, 5)
        w_ih = jax.random.uniform(k1, (d_in, 4 * H), jnp.float32, -bound, bound)
        w_hh = jax.random.uniform(k2, (H, 4 * H), jnp.float32, -bound, bound)
        b_ih = jax.random.uniform(k3, (1, 4 * H), jnp.float32, -bound, bound)
        b_hh = jax.random.uniform(k4, (1, 4 * H), jnp.float32, -bound, bound)
        params["layers"].append({"w_ih": w_ih, "w_hh": w_hh, "b": b_ih + b_hh})
    key, k5, k6 = jax.random.split(key, 3)
    params["fc_w"] = jax.random.uniform(k5, (H, output_size), jnp.float32, -bound, bound)
    params["fc_b"] = jax.random.uniform(k6, (1, output_size), jnp.float32, -bound, bound)
    return params


@jax.jit
def lstm_model_forward(params, x_btd):
    """Forward pass equivalent to LSTMModel.forward (eval mode).

    x_btd: (B, T, input_size) -> (B, output_size)
    """
    B, T, D = x_btd.shape
    num_layers = len(params["layers"])
    H = params["layers"][0]["w_hh"].shape[0]
    O = params["fc_w"].shape[-1]
    Bp = max(8, ((B + 7) // 8) * 8)  # pad batch to a sublane multiple (free on HW)

    # Cast to bf16 first (halves bytes moved by the layout ops), then time-major + pad.
    x = x_btd.astype(jnp.bfloat16)
    x = jnp.transpose(x, (1, 0, 2))                      # (T, B, D)
    x = jnp.pad(x, ((0, 0), (0, Bp - B), (0, 0))).reshape(T * Bp, D)

    args = [x]
    for lp in params["layers"]:
        args += [lp["w_ih"].astype(jnp.bfloat16),
                 lp["w_hh"].astype(jnp.bfloat16),
                 lp["b"]]
    args += [params["fc_w"].astype(jnp.bfloat16), params["fc_b"]]

    kernel = functools.partial(_fused_lstm_fc_kernel, num_layers=num_layers,
                               seq_len=T, batch_pad=Bp, hidden=H)

    # VMEM budget (grid-less call -> no double buffering): inputs + scratch + slack.
    vmem_bytes = 2 * T * Bp * D                               # x (bf16)
    for lp in params["layers"]:
        d_in = lp["w_ih"].shape[0]
        vmem_bytes += 2 * (d_in * 4 * H + H * 4 * H) + 4 * 4 * H
    vmem_bytes += 2 * H * O + 4 * O + 4 * Bp * O              # fc + out
    vmem_bytes += 4 * T * Bp * 4 * H                          # gx scratch (f32)
    vmem_bytes += 4 * T * Bp * H                              # hseq scratch (f32)
    vmem_limit = min(max(vmem_bytes + (4 << 20), 16 << 20), 64 << 20)  # v7x-safe cap

    out = pl.pallas_call(
        kernel,
        out_shape=jax.ShapeDtypeStruct((Bp, O), jnp.float32),
        in_specs=[_vmem_spec()] * len(args),
        out_specs=_vmem_spec(),
        scratch_shapes=[
            pltpu.VMEM((T * Bp, 4 * H), jnp.float32),   # hoisted fused-gate projections
            pltpu.VMEM((T * Bp, H), jnp.float32),       # previous layer's hidden sequence
        ],
        compiler_params=pltpu.CompilerParams(vmem_limit_bytes=vmem_limit),
    )(*args)
    return out[:B]


# ----------------------------- pure-JAX reference ---------------------------


def _reference_forward(params, x_btd):
    """Mirrors the kernel's math (bf16 matmul operands, f32 accumulation / gate math)."""
    x = jnp.transpose(x_btd, (1, 0, 2)).astype(jnp.bfloat16)  # (T, B, D)
    T, B, _ = x.shape
    H = params["layers"][0]["w_hh"].shape[0]
    seq = x
    h = None
    for lp in params["layers"]:
        w_ih = lp["w_ih"].astype(jnp.bfloat16)
        w_hh = lp["w_hh"].astype(jnp.bfloat16)
        b = lp["b"]
        h = jnp.zeros((B, H), jnp.float32)
        c = jnp.zeros((B, H), jnp.float32)
        outs = []
        for t in range(T):
            gates = (
                jnp.dot(seq[t], w_ih, preferred_element_type=jnp.float32)
                + jnp.dot(h.astype(jnp.bfloat16), w_hh, preferred_element_type=jnp.float32)
                + b
            )
            i_g = jax.nn.sigmoid(gates[:, :H])
            f_g = jax.nn.sigmoid(gates[:, H:2 * H])
            o_g = jax.nn.sigmoid(gates[:, 2 * H:3 * H])
            g_g = jnp.tanh(gates[:, 3 * H:])
            c = f_g * c + i_g * g_g
            h = o_g * jnp.tanh(c)
            outs.append(h)
        seq = jnp.stack(outs, axis=0).astype(jnp.bfloat16)
    return (
        jnp.dot(h.astype(jnp.bfloat16), params["fc_w"].astype(jnp.bfloat16),
                preferred_element_type=jnp.float32)
        + params["fc_b"]
    )


# ---------------------------------- main -------------------------------------


if __name__ == "__main__":
    B, T = 2, 8
    input_size, hidden_size, output_size, num_layers = 16, 32, 4, 2

    key = jax.random.PRNGKey(0)
    key, kx, kp = jax.random.split(key, 3)
    x = jax.random.normal(kx, (B, T, input_size), jnp.float32)
    params = init_params(kp, input_size, hidden_size, output_size, num_layers)

    out = lstm_model_forward(params, x)
    out = jax.block_until_ready(out)

    ref = _reference_forward(params, x)
    assert out.shape == (B, output_size), out.shape
    assert jnp.allclose(out, ref, atol=2e-3, rtol=2e-3), (out, ref)

    print("KERNEL_OK")
</pallas_src>

<mosaic_0001>
module attributes {stable_mosaic.version = 11 : i64} {
  func.func @_fused_lstm_fc_kernel(%arg0: memref<64x16xbf16, #tpu.memory_space<vmem>>, %arg1: memref<16x128xbf16, #tpu.memory_space<vmem>>, %arg2: memref<32x128xbf16, #tpu.memory_space<vmem>>, %arg3: memref<1x128xf32, #tpu.memory_space<vmem>>, %arg4: memref<32x128xbf16, #tpu.memory_space<vmem>>, %arg5: memref<32x128xbf16, #tpu.memory_space<vmem>>, %arg6: memref<1x128xf32, #tpu.memory_space<vmem>>, %arg7: memref<32x4xbf16, #tpu.memory_space<vmem>>, %arg8: memref<1x4xf32, #tpu.memory_space<vmem>>, %arg9: memref<8x4xf32, #tpu.memory_space<vmem>>, %arg10: memref<64x128xf32, #tpu.memory_space<vmem>>, %arg11: memref<64x32xf32, #tpu.memory_space<vmem>>) attributes {dimension_semantics = [], scalar_prefetch = 0 : i64, scratch_operands = 2 : i64, tpu.core_type = #tpu.core_type<tc>} {
    %c0 = arith.constant 0 : index
    %c0_0 = arith.constant 0 : index
    %0 = vector.load %arg0[%c0, %c0_0] : memref<64x16xbf16, #tpu.memory_space<vmem>>, vector<64x16xbf16>
    %c0_1 = arith.constant 0 : index
    %c0_2 = arith.constant 0 : index
    %1 = vector.load %arg1[%c0_1, %c0_2] : memref<16x128xbf16, #tpu.memory_space<vmem>>, vector<16x128xbf16>
    %cst = arith.constant dense<0.000000e+00> : vector<64x128xf32>
    %2 = tpu.matmul %0, %1, %cst {dimension_numbers = #tpu.dot_dimension_numbers<[1], [0], [0], [1], [0, 0, 1, 1], [], []>} : vector<64x16xbf16>, vector<16x128xbf16>, vector<64x128xf32> -> vector<64x128xf32>
    %c0_3 = arith.constant 0 : index
    %c0_4 = arith.constant 0 : index
    %3 = vector.load %arg3[%c0_3, %c0_4] : memref<1x128xf32, #tpu.memory_space<vmem>>, vector<1x128xf32>
    %4 = vector.broadcast %3 : vector<1x128xf32> to vector<64x128xf32>
    %5 = arith.addf %2, %4 : vector<64x128xf32>
    %c0_5 = arith.constant 0 : index
    %c0_6 = arith.constant 0 : index
    %6 = vector.load %arg10[%c0_5, %c0_6] : memref<64x128xf32, #tpu.memory_space<vmem>>, vector<64x128xf32>
    tpu.vector_store %arg10[%c0_5, %c0_6], %5 {strides = array<i32>} : memref<64x128xf32, #tpu.memory_space<vmem>>, vector<64x128xf32>,
    %c0_7 = arith.constant 0 : index
    %c0_8 = arith.constant 0 : index
    %7 = vector.load %arg2[%c0_7, %c0_8] : memref<32x128xbf16, #tpu.memory_space<vmem>>, vector<32x128xbf16>
    %cst_9 = arith.constant 0.000000e+00 : f32
    %8 = vector.broadcast %cst_9 : f32 to vector<8x32xf32>
    %c0_i32 = arith.constant 0 : i32
    %c8_i32 = arith.constant 8 : i32
    %9 = arith.muli %c0_i32, %c8_i32 : i32
    %10 = tpu.assume_multiple %9, 8 : i32
    %11 = arith.index_cast %10 : i32 to index
    %c0_10 = arith.constant 0 : index
    %12 = vector.load %arg10[%11, %c0_10] : memref<64x128xf32, #tpu.memory_space<vmem>>, vector<8x128xf32>
    %13 = arith.truncf %8 : vector<8x32xf32> to vector<8x32xbf16>
    %cst_11 = arith.constant dense<0.000000e+00> : vector<8x128xf32>
    %14 = tpu.matmul %13, %7, %cst_11 {dimension_numbers = #tpu.dot_dimension_numbers<[1], [0], [0], [1], [0, 0, 1, 1], [], []>} : vector<8x32xbf16>, vector<32x128xbf16>, vector<8x128xf32> -> vector<8x128xf32>
    %15 = arith.addf %12, %14 : vector<8x128xf32>
    %16 = vector.extract_strided_slice %15 {offsets = [0, 0], sizes = [8, 96], strides = [1, 1]} : vector<8x128xf32> to vector<8x96xf32>
    %17 = arith.negf %16 : vector<8x96xf32>
    %18 = math.exp %17 : vector<8x96xf32>
    %cst_12 = arith.constant 1.000000e+00 : f32
    %19 = vector.broadcast %cst_12 : f32 to vector<8x96xf32>
    %20 = arith.addf %19, %18 : vector<8x96xf32>
    %21 = arith.divf %19, %20 : vector<8x96xf32>
    %22 = vector.extract_strided_slice %15 {offsets = [0, 96], sizes = [8, 32], strides = [1, 1]} : vector<8x128xf32> to vector<8x32xf32>
    %23 = math.tanh %22 : vector<8x32xf32>
    %24 = vector.extract_strided_slice %21 {offsets = [0, 0], sizes = [8, 32], strides = [1, 1]} : vector<8x96xf32> to vector<8x32xf32>
    %25 = vector.extract_strided_slice %21 {offsets = [0, 32], sizes = [8, 32], strides = [1, 1]} : vector<8x96xf32> to vector<8x32xf32>
    %26 = vector.extract_strided_slice %21 {offsets = [0, 64], sizes = [8, 32], strides = [1, 1]} : vector<8x96xf32> to vector<8x32xf32>
    %27 = arith.mulf %25, %8 : vector<8x32xf32>
    %28 = arith.mulf %24, %23 : vector<8x32xf32>
    %29 = arith.addf %27, %28 : vector<8x32xf32>
    %30 = math.tanh %29 : vector<8x32xf32>
    %31 = arith.mulf %26, %30 : vector<8x32xf32>
    %32 = arith.index_cast %10 : i32 to index
    %c0_13 = arith.constant 0 : index
    %33 = vector.load %arg11[%32, %c0_13] : memref<64x32xf32, #tpu.memory_space<vmem>>, vector<8x32xf32>
    tpu.vector_store %arg11[%32, %c0_13], %31 {strides = array<i32>} : memref<64x32xf32, #tpu.memory_space<vmem>>, vector<8x32xf32>,
    %c1_i32 = arith.constant 1 : i32
    %c8_i32_14 = arith.constant 8 : i32
    %34 = arith.muli %c1_i32, %c8_i32_14 : i32
    %35 = tpu.assume_multiple %34, 8 : i32
    %36 = arith.index_cast %35 : i32 to index
    %c0_15 = arith.constant 0 : index
    %37 = vector.load %arg10[%36, %c0_15] : memref<64x128xf32, #tpu.memory_space<vmem>>, vector<8x128xf32>
    %38 = arith.truncf %31 : vector<8x32xf32> to vector<8x32xbf16>
    %cst_16 = arith.constant dense<0.000000e+00> : vector<8x128xf32>
    %39 = tpu.matmul %38, %7, %cst_16 {dimension_numbers = #tpu.dot_dimension_numbers<[1], [0], [0], [1], [0, 0, 1, 1], [], []>} : vector<8x32xbf16>, vector<32x128xbf16>, vector<8x128xf32> -> vector<8x128xf32>
    %40 = arith.addf %37, %39 : vector<8x128xf32>
    %41 = vector.extract_strided_slice %40 {offsets = [0, 0], sizes = [8, 96], strides = [1, 1]} : vector<8x128xf32> to vector<8x96xf32>
    %42 = arith.negf %41 : vector<8x96xf32>
    %43 = math.exp %42 : vector<8x96xf32>
    %cst_17 = arith.constant 1.000000e+00 : f32
    %44 = vector.broadcast %cst_17 : f32 to vector<8x96xf32>
    %45 = arith.addf %44, %43 : vector<8x96xf32>
    %46 = arith.divf %44, %45 : vector<8x96xf32>
    %47 = vector.extract_strided_slice %40 {offsets = [0, 96], sizes = [8, 32], strides = [1, 1]} : vector<8x128xf32> to vector<8x32xf32>
    %48 = math.tanh %47 : vector<8x32xf32>
    %49 = vector.extract_strided_slice %46 {offsets = [0, 0], sizes = [8, 32], strides = [1, 1]} : vector<8x96xf32> to vector<8x32xf32>
    %50 = vector.extract_strided_slice %46 {offsets = [0, 32], sizes = [8, 32], strides = [1, 1]} : vector<8x96xf32> to vector<8x32xf32>
    %51 = vector.extract_strided_slice %46 {offsets = [0, 64], sizes = [8, 32], strides = [1, 1]} : vector<8x96xf32> to vector<8x32xf32>
    %52 = arith.mulf %50, %29 : vector<8x32xf32>
    %53 = arith.mulf %49, %48 : vector<8x32xf32>
    %54 = arith.addf %52, %53 : vector<8x32xf32>
    %55 = math.tanh %54 : vector<8x32xf32>
    %56 = arith.mulf %51, %55 : vector<8x32xf32>
    %57 = arith.index_cast %35 : i32 to index
    %c0_18 = arith.constant 0 : index
    %58 = vector.load %arg11[%57, %c0_18] : memref<64x32xf32, #tpu.memory_space<vmem>>, vector<8x32xf32>
    tpu.vector_store %arg11[%57, %c0_18], %56 {strides = array<i32>} : memref<64x32xf32, #tpu.memory_space<vmem>>, vector<8x32xf32>,
    %c2_i32 = arith.constant 2 : i32
    %c8_i32_19 = arith.constant 8 : i32
    %59 = arith.muli %c2_i32, %c8_i32_19 : i32
    %60 = tpu.assume_multiple %59, 8 : i32
    %61 = arith.index_cast %60 : i32 to index
    %c0_20 = arith.constant 0 : index
    %62 = vector.load %arg10[%61, %c0_20] : memref<64x128xf32, #tpu.memory_space<vmem>>, vector<8x128xf32>
    %63 = arith.truncf %56 : vector<8x32xf32> to vector<8x32xbf16>
    %cst_21 = arith.constant dense<0.000000e+00> : vector<8x128xf32>
    %64 = tpu.matmul %63, %7, %cst_21 {dimension_numbers = #tpu.dot_dimension_numbers<[1], [0], [0], [1], [0, 0, 1, 1], [], []>} : vector<8x32xbf16>, vector<32x128xbf16>, vector<8x128xf32> -> vector<8x128xf32>
    %65 = arith.addf %62, %64 : vector<8x128xf32>
    %66 = vector.extract_strided_slice %65 {offsets = [0, 0], sizes = [8, 96], strides = [1, 1]} : vector<8x128xf32> to vector<8x96xf32>
    %67 = arith.negf %66 : vector<8x96xf32>
    %68 = math.exp %67 : vector<8x96xf32>
    %cst_22 = arith.constant 1.000000e+00 : f32
    %69 = vector.broadcast %cst_22 : f32 to vector<8x96xf32>
    %70 = arith.addf %69, %68 : vector<8x96xf32>
    %71 = arith.divf %69, %70 : vector<8x96xf32>
    %72 = vector.extract_strided_slice %65 {offsets = [0, 96], sizes = [8, 32], strides = [1, 1]} : vector<8x128xf32> to vector<8x32xf32>
    %73 = math.tanh %72 : vector<8x32xf32>
    %74 = vector.extract_strided_slice %71 {offsets = [0, 0], sizes = [8, 32], strides = [1, 1]} : vector<8x96xf32> to vector<8x32xf32>
    %75 = vector.extract_strided_slice %71 {offsets = [0, 32], sizes = [8, 32], strides = [1, 1]} : vector<8x96xf32> to vector<8x32xf32>
    %76 = vector.extract_strided_slice %71 {offsets = [0, 64], sizes = [8, 32], strides = [1, 1]} : vector<8x96xf32> to vector<8x32xf32>
    %77 = arith.mulf %75, %54 : vector<8x32xf32>
    %78 = arith.mulf %74, %73 : vector<8x32xf32>
    %79 = arith.addf %77, %78 : vector<8x32xf32>
    %80 = math.tanh %79 : vector<8x32xf32>
    %81 = arith.mulf %76, %80 : vector<8x32xf32>
    %82 = arith.index_cast %60 : i32 to index
    %c0_23 = arith.constant 0 : index
    %83 = vector.load %arg11[%82, %c0_23] : memref<64x32xf32, #tpu.memory_space<vmem>>, vector<8x32xf32>
    tpu.vector_store %arg11[%82, %c0_23], %81 {strides = array<i32>} : memref<64x32xf32, #tpu.memory_space<vmem>>, vector<8x32xf32>,
    %c3_i32 = arith.constant 3 : i32
    %c8_i32_24 = arith.constant 8 : i32
    %84 = arith.muli %c3_i32, %c8_i32_24 : i32
    %85 = tpu.assume_multiple %84, 8 : i32
    %86 = arith.index_cast %85 : i32 to index
    %c0_25 = arith.constant 0 : index
    %87 = vector.load %arg10[%86, %c0_25] : memref<64x128xf32, #tpu.memory_space<vmem>>, vector<8x128xf32>
    %88 = arith.truncf %81 : vector<8x32xf32> to vector<8x32xbf16>
    %cst_26 = arith.constant dense<0.000000e+00> : vector<8x128xf32>
    %89 = tpu.matmul %88, %7, %cst_26 {dimension_numbers = #tpu.dot_dimension_numbers<[1], [0], [0], [1], [0, 0, 1, 1], [], []>} : vector<8x32xbf16>, vector<32x128xbf16>, vector<8x128xf32> -> vector<8x128xf32>
    %90 = arith.addf %87, %89 : vector<8x128xf32>
    %91 = vector.extract_strided_slice %90 {offsets = [0, 0], sizes = [8, 96], strides = [1, 1]} : vector<8x128xf32> to vector<8x96xf32>
    %92 = arith.negf %91 : vector<8x96xf32>
    %93 = math.exp %92 : vector<8x96xf32>
    %cst_27 = arith.constant 1.000000e+00 : f32
    %94 = vector.broadcast %cst_27 : f32 to vector<8x96xf32>
    %95 = arith.addf %94, %93 : vector<8x96xf32>
    %96 = arith.divf %94, %95 : vector<8x96xf32>
    %97 = vector.extract_strided_slice %90 {offsets = [0, 96], sizes = [8, 32], strides = [1, 1]} : vector<8x128xf32> to vector<8x32xf32>
    %98 = math.tanh %97 : vector<8x32xf32>
    %99 = vector.extract_strided_slice %96 {offsets = [0, 0], sizes = [8, 32], strides = [1, 1]} : vector<8x96xf32> to vector<8x32xf32>
    %100 = vector.extract_strided_slice %96 {offsets = [0, 32], sizes = [8, 32], strides = [1, 1]} : vector<8x96xf32> to vector<8x32xf32>
    %101 = vector.extract_strided_slice %96 {offsets = [0, 64], sizes = [8, 32], strides = [1, 1]} : vector<8x96xf32> to vector<8x32xf32>
    %102 = arith.mulf %100, %79 : vector<8x32xf32>
    %103 = arith.mulf %99, %98 : vector<8x32xf32>
    %104 = arith.addf %102, %103 : vector<8x32xf32>
    %105 = math.tanh %104 : vector<8x32xf32>
    %106 = arith.mulf %101, %105 : vector<8x32xf32>
    %107 = arith.index_cast %85 : i32 to index
    %c0_28 = arith.constant 0 : index
    %108 = vector.load %arg11[%107, %c0_28] : memref<64x32xf32, #tpu.memory_space<vmem>>, vector<8x32xf32>
    tpu.vector_store %arg11[%107, %c0_28], %106 {strides = array<i32>} : memref<64x32xf32, #tpu.memory_space<vmem>>, vector<8x32xf32>,
    %c4_i32 = arith.constant 4 : i32
    %c8_i32_29 = arith.constant 8 : i32
    %109 = arith.muli %c4_i32, %c8_i32_29 : i32
    %110 = tpu.assume_multiple %109, 8 : i32
    %111 = arith.index_cast %110 : i32 to index
    %c0_30 = arith.constant 0 : index
    %112 = vector.load %arg10[%111, %c0_30] : memref<64x128xf32, #tpu.memory_space<vmem>>, vector<8x128xf32>
    %113 = arith.truncf %106 : vector<8x32xf32> to vector<8x32xbf16>
    %cst_31 = arith.constant dense<0.000000e+00> : vector<8x128xf32>
    %114 = tpu.matmul %113, %7, %cst_31 {dimension_numbers = #tpu.dot_dimension_numbers<[1], [0], [0], [1], [0, 0, 1, 1], [], []>} : vector<8x32xbf16>, vector<32x128xbf16>, vector<8x128xf32> -> vector<8x128xf32>
    %115 = arith.addf %112, %114 : vector<8x128xf32>
    %116 = vector.extract_strided_slice %115 {offsets = [0, 0], sizes = [8, 96], strides = [1, 1]} : vector<8x128xf32> to vector<8x96xf32>
    %117 = arith.negf %116 : vector<8x96xf32>
    %118 = math.exp %117 : vector<8x96xf32>
    %cst_32 = arith.constant 1.000000e+00 : f32
    %119 = vector.broadcast %cst_32 : f32 to vector<8x96xf32>
    %120 = arith.addf %119, %118 : vector<8x96xf32>
    %121 = arith.divf %119, %120 : vector<8x96xf32>
    %122 = vector.extract_strided_slice %115 {offsets = [0, 96], sizes = [8, 32], strides = [1, 1]} : vector<8x128xf32> to vector<8x32xf32>
    %123 = math.tanh %122 : vector<8x32xf32>
    %124 = vector.extract_strided_slice %121 {offsets = [0, 0], sizes = [8, 32], strides = [1, 1]} : vector<8x96xf32> to vector<8x32xf32>
    %125 = vector.extract_strided_slice %121 {offsets = [0, 32], sizes = [8, 32], strides = [1, 1]} : vector<8x96xf32> to vector<8x32xf32>
    %126 = vector.extract_strided_slice %121 {offsets = [0, 64], sizes = [8, 32], strides = [1, 1]} : vector<8x96xf32> to vector<8x32xf32>
    %127 = arith.mulf %125, %104 : vector<8x32xf32>
    %128 = arith.mulf %124, %123 : vector<8x32xf32>
    %129 = arith.addf %127, %128 : vector<8x32xf32>
    %130 = math.tanh %129 : vector<8x32xf32>
    %131 = arith.mulf %126, %130 : vector<8x32xf32>
    %132 = arith.index_cast %110 : i32 to index
    %c0_33 = arith.constant 0 : index
    %133 = vector.load %arg11[%132, %c0_33] : memref<64x32xf32, #tpu.memory_space<vmem>>, vector<8x32xf32>
    tpu.vector_store %arg11[%132, %c0_33], %131 {strides = array<i32>} : memref<64x32xf32, #tpu.memory_space<vmem>>, vector<8x32xf32>,
    %c5_i32 = arith.constant 5 : i32
    %c8_i32_34 = arith.constant 8 : i32
    %134 = arith.muli %c5_i32, %c8_i32_34 : i32
    %135 = tpu.assume_multiple %134, 8 : i32
    %136 = arith.index_cast %135 : i32 to index
    %c0_35 = arith.constant 0 : index
    %137 = vector.load %arg10[%136, %c0_35] : memref<64x128xf32, #tpu.memory_space<vmem>>, vector<8x128xf32>
    %138 = arith.truncf %131 : vector<8x32xf32> to vector<8x32xbf16>
    %cst_36 = arith.constant dense<0.000000e+00> : vector<8x128xf32>
    %139 = tpu.matmul %138, %7, %cst_36 {dimension_numbers = #tpu.dot_dimension_numbers<[1], [0], [0], [1], [0, 0, 1, 1], [], []>} : vector<8x32xbf16>, vector<32x128xbf16>, vector<8x128xf32> -> vector<8x128xf32>
    %140 = arith.addf %137, %139 : vector<8x128xf32>
    %141 = vector.extract_strided_slice %140 {offsets = [0, 0], sizes = [8, 96], strides = [1, 1]} : vector<8x128xf32> to vector<8x96xf32>
    %142 = arith.negf %141 : vector<8x96xf32>
    %143 = math.exp %142 : vector<8x96xf32>
    %cst_37 = arith.constant 1.000000e+00 : f32
    %144 = vector.broadcast %cst_37 : f32 to vector<8x96xf32>
    %145 = arith.addf %144, %143 : vector<8x96xf32>
    %146 = arith.divf %144, %145 : vector<8x96xf32>
    %147 = vector.extract_strided_slice %140 {offsets = [0, 96], sizes = [8, 32], strides = [1, 1]} : vector<8x128xf32> to vector<8x32xf32>
    %148 = math.tanh %147 : vector<8x32xf32>
    %149 = vector.extract_strided_slice %146 {offsets = [0, 0], sizes = [8, 32], strides = [1, 1]} : vector<8x96xf32> to vector<8x32xf32>
    %150 = vector.extract_strided_slice %146 {offsets = [0, 32], sizes = [8, 32], strides = [1, 1]} : vector<8x96xf32> to vector<8x32xf32>
    %151 = vector.extract_strided_slice %146 {offsets = [0, 64], sizes = [8, 32], strides = [1, 1]} : vector<8x96xf32> to vector<8x32xf32>
    %152 = arith.mulf %150, %129 : vector<8x32xf32>
    %153 = arith.mulf %149, %148 : vector<8x32xf32>
    %154 = arith.addf %152, %153 : vector<8x32xf32>
    %155 = math.tanh %154 : vector<8x32xf32>
    %156 = arith.mulf %151, %155 : vector<8x32xf32>
    %157 = arith.index_cast %135 : i32 to index
    %c0_38 = arith.constant 0 : index
    %158 = vector.load %arg11[%157, %c0_38] : memref<64x32xf32, #tpu.memory_space<vmem>>, vector<8x32xf32>
    tpu.vector_store %arg11[%157, %c0_38], %156 {strides = array<i32>} : memref<64x32xf32, #tpu.memory_space<vmem>>, vector<8x32xf32>,
    %c6_i32 = arith.constant 6 : i32
    %c8_i32_39 = arith.constant 8 : i32
    %159 = arith.muli %c6_i32, %c8_i32_39 : i32
    %160 = tpu.assume_multiple %159, 8 : i32
    %161 = arith.index_cast %160 : i32 to index
    %c0_40 = arith.constant 0 : index
    %162 = vector.load %arg10[%161, %c0_40] : memref<64x128xf32, #tpu.memory_space<vmem>>, vector<8x128xf32>
    %163 = arith.truncf %156 : vector<8x32xf32> to vector<8x32xbf16>
    %cst_41 = arith.constant dense<0.000000e+00> : vector<8x128xf32>
    %164 = tpu.matmul %163, %7, %cst_41 {dimension_numbers = #tpu.dot_dimension_numbers<[1], [0], [0], [1], [0, 0, 1, 1], [], []>} : vector<8x32xbf16>, vector<32x128xbf16>, vector<8x128xf32> -> vector<8x128xf32>
    %165 = arith.addf %162, %164 : vector<8x128xf32>
    %166 = vector.extract_strided_slice %165 {offsets = [0, 0], sizes = [8, 96], strides = [1, 1]} : vector<8x128xf32> to vector<8x96xf32>
    %167 = arith.negf %166 : vector<8x96xf32>
    %168 = math.exp %167 : vector<8x96xf32>
    %cst_42 = arith.constant 1.000000e+00 : f32
    %169 = vector.broadcast %cst_42 : f32 to vector<8x96xf32>
    %170 = arith.addf %169, %168 : vector<8x96xf32>
    %171 = arith.divf %169, %170 : vector<8x96xf32>
    %172 = vector.extract_strided_slice %165 {offsets = [0, 96], sizes = [8, 32], strides = [1, 1]} : vector<8x128xf32> to vector<8x32xf32>
    %173 = math.tanh %172 : vector<8x32xf32>
    %174 = vector.extract_strided_slice %171 {offsets = [0, 0], sizes = [8, 32], strides = [1, 1]} : vector<8x96xf32> to vector<8x32xf32>
    %175 = vector.extract_strided_slice %171 {offsets = [0, 32], sizes = [8, 32], strides = [1, 1]} : vector<8x96xf32> to vector<8x32xf32>
    %176 = vector.extract_strided_slice %171 {offsets = [0, 64], sizes = [8, 32], strides = [1, 1]} : vector<8x96xf32> to vector<8x32xf32>
    %177 = arith.mulf %175, %154 : vector<8x32xf32>
    %178 = arith.mulf %174, %173 : vector<8x32xf32>
    %179 = arith.addf %177, %178 : vector<8x32xf32>
    %180 = math.tanh %179 : vector<8x32xf32>
    %181 = arith.mulf %176, %180 : vector<8x32xf32>
    %182 = arith.index_cast %160 : i32 to index
    %c0_43 = arith.constant 0 : index
    %183 = vector.load %arg11[%182, %c0_43] : memref<64x32xf32, #tpu.memory_space<vmem>>, vector<8x32xf32>
    tpu.vector_store %arg11[%182, %c0_43], %181 {strides = array<i32>} : memref<64x32xf32, #tpu.memory_space<vmem>>, vector<8x32xf32>,
    %c7_i32 = arith.constant 7 : i32
    %c8_i32_44 = arith.constant 8 : i32
    %184 = arith.muli %c7_i32, %c8_i32_44 : i32
    %185 = tpu.assume_multiple %184, 8 : i32
    %186 = arith.index_cast %185 : i32 to index
    %c0_45 = arith.constant 0 : index
    %187 = vector.load %arg10[%186, %c0_45] : memref<64x128xf32, #tpu.memory_space<vmem>>, vector<8x128xf32>
    %188 = arith.truncf %181 : vector<8x32xf32> to vector<8x32xbf16>
    %cst_46 = arith.constant dense<0.000000e+00> : vector<8x128xf32>
    %189 = tpu.matmul %188, %7, %cst_46 {dimension_numbers = #tpu.dot_dimension_numbers<[1], [0], [0], [1], [0, 0, 1, 1], [], []>} : vector<8x32xbf16>, vector<32x128xbf16>, vector<8x128xf32> -> vector<8x128xf32>
    %190 = arith.addf %187, %189 : vector<8x128xf32>
    %191 = vector.extract_strided_slice %190 {offsets = [0, 0], sizes = [8, 96], strides = [1, 1]} : vector<8x128xf32> to vector<8x96xf32>
    %192 = arith.negf %191 : vector<8x96xf32>
    %193 = math.exp %192 : vector<8x96xf32>
    %cst_47 = arith.constant 1.000000e+00 : f32
    %194 = vector.broadcast %cst_47 : f32 to vector<8x96xf32>
    %195 = arith.addf %194, %193 : vector<8x96xf32>
    %196 = arith.divf %194, %195 : vector<8x96xf32>
    %197 = vector.extract_strided_slice %190 {offsets = [0, 96], sizes = [8, 32], strides = [1, 1]} : vector<8x128xf32> to vector<8x32xf32>
    %198 = math.tanh %197 : vector<8x32xf32>
    %199 = vector.extract_strided_slice %196 {offsets = [0, 0], sizes = [8, 32], strides = [1, 1]} : vector<8x96xf32> to vector<8x32xf32>
    %200 = vector.extract_strided_slice %196 {offsets = [0, 32], sizes = [8, 32], strides = [1, 1]} : vector<8x96xf32> to vector<8x32xf32>
    %201 = vector.extract_strided_slice %196 {offsets = [0, 64], sizes = [8, 32], strides = [1, 1]} : vector<8x96xf32> to vector<8x32xf32>
    %202 = arith.mulf %200, %179 : vector<8x32xf32>
    %203 = arith.mulf %199, %198 : vector<8x32xf32>
    %204 = arith.addf %202, %203 : vector<8x32xf32>
    %205 = math.tanh %204 : vector<8x32xf32>
    %206 = arith.mulf %201, %205 : vector<8x32xf32>
    %207 = arith.index_cast %185 : i32 to index
    %c0_48 = arith.constant 0 : index
    %208 = vector.load %arg11[%207, %c0_48] : memref<64x32xf32, #tpu.memory_space<vmem>>, vector<8x32xf32>
    tpu.vector_store %arg11[%207, %c0_48], %206 {strides = array<i32>} : memref<64x32xf32, #tpu.memory_space<vmem>>, vector<8x32xf32>,
    %c8_i32_49 = arith.constant 8 : i32
    %c0_50 = arith.constant 0 : index
    %c0_51 = arith.constant 0 : index
    %209 = vector.load %arg11[%c0_50, %c0_51] : memref<64x32xf32, #tpu.memory_space<vmem>>, vector<64x32xf32>
    %210 = arith.truncf %209 : vector<64x32xf32> to vector<64x32xbf16>
    %c0_52 = arith.constant 0 : index
    %c0_53 = arith.constant 0 : index
    %211 = vector.load %arg4[%c0_52, %c0_53] : memref<32x128xbf16, #tpu.memory_space<vmem>>, vector<32x128xbf16>
    %cst_54 = arith.constant dense<0.000000e+00> : vector<64x128xf32>
    %212 = tpu.matmul %210, %211, %cst_54 {dimension_numbers = #tpu.dot_dimension_numbers<[1], [0], [0], [1], [0, 0, 1, 1], [], []>} : vector<64x32xbf16>, vector<32x128xbf16>, vector<64x128xf32> -> vector<64x128xf32>
    %c0_55 = arith.constant 0 : index
    %c0_56 = arith.constant 0 : index
    %213 = vector.load %arg6[%c0_55, %c0_56] : memref<1x128xf32, #tpu.memory_space<vmem>>, vector<1x128xf32>
    %214 = vector.broadcast %213 : vector<1x128xf32> to vector<64x128xf32>
    %215 = arith.addf %212, %214 : vector<64x128xf32>
    %c0_57 = arith.constant 0 : index
    %c0_58 = arith.constant 0 : index
    %216 = vector.load %arg10[%c0_57, %c0_58] : memref<64x128xf32, #tpu.memory_space<vmem>>, vector<64x128xf32>
    tpu.vector_store %arg10[%c0_57, %c0_58], %215 {strides = array<i32>} : memref<64x128xf32, #tpu.memory_space<vmem>>, vector<64x128xf32>,
    %c0_59 = arith.constant 0 : index
    %c0_60 = arith.constant 0 : index
    %217 = vector.load %arg5[%c0_59, %c0_60] : memref<32x128xbf16, #tpu.memory_space<vmem>>, vector<32x128xbf16>
    %cst_61 = arith.constant 0.000000e+00 : f32
    %218 = vector.broadcast %cst_61 : f32 to vector<8x32xf32>
    %c0_i32_62 = arith.constant 0 : i32
    %c8_i32_63 = arith.constant 8 : i32
    %219 = arith.muli %c0_i32_62, %c8_i32_63 : i32
    %220 = tpu.assume_multiple %219, 8 : i32
    %221 = arith.index_cast %220 : i32 to index
    %c0_64 = arith.constant 0 : index
    %222 = vector.load %arg10[%221, %c0_64] : memref<64x128xf32, #tpu.memory_space<vmem>>, vector<8x128xf32>
    %223 = arith.truncf %218 : vector<8x32xf32> to vector<8x32xbf16>
    %cst_65 = arith.constant dense<0.000000e+00> : vector<8x128xf32>
    %224 = tpu.matmul %223, %217, %cst_65 {dimension_numbers = #tpu.dot_dimension_numbers<[1], [0], [0], [1], [0, 0, 1, 1], [], []>} : vector<8x32xbf16>, vector<32x128xbf16>, vector<8x128xf32> -> vector<8x128xf32>
    %225 = arith.addf %222, %224 : vector<8x128xf32>
    %226 = vector.extract_strided_slice %225 {offsets = [0, 0], sizes = [8, 96], strides = [1, 1]} : vector<8x128xf32> to vector<8x96xf32>
    %227 = arith.negf %226 : vector<8x96xf32>
    %228 = math.exp %227 : vector<8x96xf32>
    %cst_66 = arith.constant 1.000000e+00 : f32
    %229 = vector.broadcast %cst_66 : f32 to vector<8x96xf32>
    %230 = arith.addf %229, %228 : vector<8x96xf32>
    %231 = arith.divf %229, %230 : vector<8x96xf32>
    %232 = vector.extract_strided_slice %225 {offsets = [0, 96], sizes = [8, 32], strides = [1, 1]} : vector<8x128xf32> to vector<8x32xf32>
    %233 = math.tanh %232 : vector<8x32xf32>
    %234 = vector.extract_strided_slice %231 {offsets = [0, 0], sizes = [8, 32], strides = [1, 1]} : vector<8x96xf32> to vector<8x32xf32>
    %235 = vector.extract_strided_slice %231 {offsets = [0, 32], sizes = [8, 32], strides = [1, 1]} : vector<8x96xf32> to vector<8x32xf32>
    %236 = vector.extract_strided_slice %231 {offsets = [0, 64], sizes = [8, 32], strides = [1, 1]} : vector<8x96xf32> to vector<8x32xf32>
    %237 = arith.mulf %235, %218 : vector<8x32xf32>
    %238 = arith.mulf %234, %233 : vector<8x32xf32>
    %239 = arith.addf %237, %238 : vector<8x32xf32>
    %240 = math.tanh %239 : vector<8x32xf32>
    %241 = arith.mulf %236, %240 : vector<8x32xf32>
    %c1_i32_67 = arith.constant 1 : i32
    %c8_i32_68 = arith.constant 8 : i32
    %242 = arith.muli %c1_i32_67, %c8_i32_68 : i32
    %243 = tpu.assume_multiple %242, 8 : i32
    %244 = arith.index_cast %243 : i32 to index
    %c0_69 = arith.constant 0 : index
    %245 = vector.load %arg10[%244, %c0_69] : memref<64x128xf32, #tpu.memory_space<vmem>>, vector<8x128xf32>
    %246 = arith.truncf %241 : vector<8x32xf32> to vector<8x32xbf16>
    %cst_70 = arith.constant dense<0.000000e+00> : vector<8x128xf32>
    %247 = tpu.matmul %246, %217, %cst_70 {dimension_numbers = #tpu.dot_dimension_numbers<[1], [0], [0], [1], [0, 0, 1, 1], [], []>} : vector<8x32xbf16>, vector<32x128xbf16>, vector<8x128xf32> -> vector<8x128xf32>
    %248 = arith.addf %245, %247 : vector<8x128xf32>
    %249 = vector.extract_strided_slice %248 {offsets = [0, 0], sizes = [8, 96], strides = [1, 1]} : vector<8x128xf32> to vector<8x96xf32>
    %250 = arith.negf %249 : vector<8x96xf32>
    %251 = math.exp %250 : vector<8x96xf32>
    %cst_71 = arith.constant 1.000000e+00 : f32
    %252 = vector.broadcast %cst_71 : f32 to vector<8x96xf32>
    %253 = arith.addf %252, %251 : vector<8x96xf32>
    %254 = arith.divf %252, %253 : vector<8x96xf32>
    %255 = vector.extract_strided_slice %248 {offsets = [0, 96], sizes = [8, 32], strides = [1, 1]} : vector<8x128xf32> to vector<8x32xf32>
    %256 = math.tanh %255 : vector<8x32xf32>
    %257 = vector.extract_strided_slice %254 {offsets = [0, 0], sizes = [8, 32], strides = [1, 1]} : vector<8x96xf32> to vector<8x32xf32>
    %258 = vector.extract_strided_slice %254 {offsets = [0, 32], sizes = [8, 32], strides = [1, 1]} : vector<8x96xf32> to vector<8x32xf32>
    %259 = vector.extract_strided_slice %254 {offsets = [0, 64], sizes = [8, 32], strides = [1, 1]} : vector<8x96xf32> to vector<8x32xf32>
    %260 = arith.mulf %258, %239 : vector<8x32xf32>
    %261 = arith.mulf %257, %256 : vector<8x32xf32>
    %262 = arith.addf %260, %261 : vector<8x32xf32>
    %263 = math.tanh %262 : vector<8x32xf32>
    %264 = arith.mulf %259, %263 : vector<8x32xf32>
    %c2_i32_72 = arith.constant 2 : i32
    %c8_i32_73 = arith.constant 8 : i32
    %265 = arith.muli %c2_i32_72, %c8_i32_73 : i32
    %266 = tpu.assume_multiple %265, 8 : i32
    %267 = arith.index_cast %266 : i32 to index
    %c0_74 = arith.constant 0 : index
    %268 = vector.load %arg10[%267, %c0_74] : memref<64x128xf32, #tpu.memory_space<vmem>>, vector<8x128xf32>
    %269 = arith.truncf %264 : vector<8x32xf32> to vector<8x32xbf16>
    %cst_75 = arith.constant dense<0.000000e+00> : vector<8x128xf32>
    %270 = tpu.matmul %269, %217, %cst_75 {dimension_numbers = #tpu.dot_dimension_numbers<[1], [0], [0], [1], [0, 0, 1, 1], [], []>} : vector<8x32xbf16>, vector<32x128xbf16>, vector<8x128xf32> -> vector<8x128xf32>
    %271 = arith.addf %268, %270 : vector<8x128xf32>
    %272 = vector.extract_strided_slice %271 {offsets = [0, 0], sizes = [8, 96], strides = [1, 1]} : vector<8x128xf32> to vector<8x96xf32>
    %273 = arith.negf %272 : vector<8x96xf32>
    %274 = math.exp %273 : vector<8x96xf32>
    %cst_76 = arith.constant 1.000000e+00 : f32
    %275 = vector.broadcast %cst_76 : f32 to vector<8x96xf32>
    %276 = arith.addf %275, %274 : vector<8x96xf32>
    %277 = arith.divf %275, %276 : vector<8x96xf32>
    %278 = vector.extract_strided_slice %271 {offsets = [0, 96], sizes = [8, 32], strides = [1, 1]} : vector<8x128xf32> to vector<8x32xf32>
    %279 = math.tanh %278 : vector<8x32xf32>
    %280 = vector.extract_strided_slice %277 {offsets = [0, 0], sizes = [8, 32], strides = [1, 1]} : vector<8x96xf32> to vector<8x32xf32>
    %281 = vector.extract_strided_slice %277 {offsets = [0, 32], sizes = [8, 32], strides = [1, 1]} : vector<8x96xf32> to vector<8x32xf32>
    %282 = vector.extract_strided_slice %277 {offsets = [0, 64], sizes = [8, 32], strides = [1, 1]} : vector<8x96xf32> to vector<8x32xf32>
    %283 = arith.mulf %281, %262 : vector<8x32xf32>
    %284 = arith.mulf %280, %279 : vector<8x32xf32>
    %285 = arith.addf %283, %284 : vector<8x32xf32>
    %286 = math.tanh %285 : vector<8x32xf32>
    %287 = arith.mulf %282, %286 : vector<8x32xf32>
    %c3_i32_77 = arith.constant 3 : i32
    %c8_i32_78 = arith.constant 8 : i32
    %288 = arith.muli %c3_i32_77, %c8_i32_78 : i32
    %289 = tpu.assume_multiple %288, 8 : i32
    %290 = arith.index_cast %289 : i32 to index
    %c0_79 = arith.constant 0 : index
    %291 = vector.load %arg10[%290, %c0_79] : memref<64x128xf32, #tpu.memory_space<vmem>>, vector<8x128xf32>
    %292 = arith.truncf %287 : vector<8x32xf32> to vector<8x32xbf16>
    %cst_80 = arith.constant dense<0.000000e+00> : vector<8x128xf32>
    %293 = tpu.matmul %292, %217, %cst_80 {dimension_numbers = #tpu.dot_dimension_numbers<[1], [0], [0], [1], [0, 0, 1, 1], [], []>} : vector<8x32xbf16>, vector<32x128xbf16>, vector<8x128xf32> -> vector<8x128xf32>
    %294 = arith.addf %291, %293 : vector<8x128xf32>
    %295 = vector.extract_strided_slice %294 {offsets = [0, 0], sizes = [8, 96], strides = [1, 1]} : vector<8x128xf32> to vector<8x96xf32>
    %296 = arith.negf %295 : vector<8x96xf32>
    %297 = math.exp %296 : vector<8x96xf32>
    %cst_81 = arith.constant 1.000000e+00 : f32
    %298 = vector.broadcast %cst_81 : f32 to vector<8x96xf32>
    %299 = arith.addf %298, %297 : vector<8x96xf32>
    %300 = arith.divf %298, %299 : vector<8x96xf32>
    %301 = vector.extract_strided_slice %294 {offsets = [0, 96], sizes = [8, 32], strides = [1, 1]} : vector<8x128xf32> to vector<8x32xf32>
    %302 = math.tanh %301 : vector<8x32xf32>
    %303 = vector.extract_strided_slice %300 {offsets = [0, 0], sizes = [8, 32], strides = [1, 1]} : vector<8x96xf32> to vector<8x32xf32>
    %304 = vector.extract_strided_slice %300 {offsets = [0, 32], sizes = [8, 32], strides = [1, 1]} : vector<8x96xf32> to vector<8x32xf32>
    %305 = vector.extract_strided_slice %300 {offsets = [0, 64], sizes = [8, 32], strides = [1, 1]} : vector<8x96xf32> to vector<8x32xf32>
    %306 = arith.mulf %304, %285 : vector<8x32xf32>
    %307 = arith.mulf %303, %302 : vector<8x32xf32>
    %308 = arith.addf %306, %307 : vector<8x32xf32>
    %309 = math.tanh %308 : vector<8x32xf32>
    %310 = arith.mulf %305, %309 : vector<8x32xf32>
    %c4_i32_82 = arith.constant 4 : i32
    %c8_i32_83 = arith.constant 8 : i32
    %311 = arith.muli %c4_i32_82, %c8_i32_83 : i32
    %312 = tpu.assume_multiple %311, 8 : i32
    %313 = arith.index_cast %312 : i32 to index
    %c0_84 = arith.constant 0 : index
    %314 = vector.load %arg10[%313, %c0_84] : memref<64x128xf32, #tpu.memory_space<vmem>>, vector<8x128xf32>
    %315 = arith.truncf %310 : vector<8x32xf32> to vector<8x32xbf16>
    %cst_85 = arith.constant dense<0.000000e+00> : vector<8x128xf32>
    %316 = tpu.matmul %315, %217, %cst_85 {dimension_numbers = #tpu.dot_dimension_numbers<[1], [0], [0], [1], [0, 0, 1, 1], [], []>} : vector<8x32xbf16>, vector<32x128xbf16>, vector<8x128xf32> -> vector<8x128xf32>
    %317 = arith.addf %314, %316 : vector<8x128xf32>
    %318 = vector.extract_strided_slice %317 {offsets = [0, 0], sizes = [8, 96], strides = [1, 1]} : vector<8x128xf32> to vector<8x96xf32>
    %319 = arith.negf %318 : vector<8x96xf32>
    %320 = math.exp %319 : vector<8x96xf32>
    %cst_86 = arith.constant 1.000000e+00 : f32
    %321 = vector.broadcast %cst_86 : f32 to vector<8x96xf32>
    %322 = arith.addf %321, %320 : vector<8x96xf32>
    %323 = arith.divf %321, %322 : vector<8x96xf32>
    %324 = vector.extract_strided_slice %317 {offsets = [0, 96], sizes = [8, 32], strides = [1, 1]} : vector<8x128xf32> to vector<8x32xf32>
    %325 = math.tanh %324 : vector<8x32xf32>
    %326 = vector.extract_strided_slice %323 {offsets = [0, 0], sizes = [8, 32], strides = [1, 1]} : vector<8x96xf32> to vector<8x32xf32>
    %327 = vector.extract_strided_slice %323 {offsets = [0, 32], sizes = [8, 32], strides = [1, 1]} : vector<8x96xf32> to vector<8x32xf32>
    %328 = vector.extract_strided_slice %323 {offsets = [0, 64], sizes = [8, 32], strides = [1, 1]} : vector<8x96xf32> to vector<8x32xf32>
    %329 = arith.mulf %327, %308 : vector<8x32xf32>
    %330 = arith.mulf %326, %325 : vector<8x32xf32>
    %331 = arith.addf %329, %330 : vector<8x32xf32>
    %332 = math.tanh %331 : vector<8x32xf32>
    %333 = arith.mulf %328, %332 : vector<8x32xf32>
    %c5_i32_87 = arith.constant 5 : i32
    %c8_i32_88 = arith.constant 8 : i32
    %334 = arith.muli %c5_i32_87, %c8_i32_88 : i32
    %335 = tpu.assume_multiple %334, 8 : i32
    %336 = arith.index_cast %335 : i32 to index
    %c0_89 = arith.constant 0 : index
    %337 = vector.load %arg10[%336, %c0_89] : memref<64x128xf32, #tpu.memory_space<vmem>>, vector<8x128xf32>
    %338 = arith.truncf %333 : vector<8x32xf32> to vector<8x32xbf16>
    %cst_90 = arith.constant dense<0.000000e+00> : vector<8x128xf32>
    %339 = tpu.matmul %338, %217, %cst_90 {dimension_numbers = #tpu.dot_dimension_numbers<[1], [0], [0], [1], [0, 0, 1, 1], [], []>} : vector<8x32xbf16>, vector<32x128xbf16>, vector<8x128xf32> -> vector<8x128xf32>
    %340 = arith.addf %337, %339 : vector<8x128xf32>
    %341 = vector.extract_strided_slice %340 {offsets = [0, 0], sizes = [8, 96], strides = [1, 1]} : vector<8x128xf32> to vector<8x96xf32>
    %342 = arith.negf %341 : vector<8x96xf32>
    %343 = math.exp %342 : vector<8x96xf32>
    %cst_91 = arith.constant 1.000000e+00 : f32
    %344 = vector.broadcast %cst_91 : f32 to vector<8x96xf32>
    %345 = arith.addf %344, %343 : vector<8x96xf32>
    %346 = arith.divf %344, %345 : vector<8x96xf32>
    %347 = vector.extract_strided_slice %340 {offsets = [0, 96], sizes = [8, 32], strides = [1, 1]} : vector<8x128xf32> to vector<8x32xf32>
    %348 = math.tanh %347 : vector<8x32xf32>
    %349 = vector.extract_strided_slice %346 {offsets = [0, 0], sizes = [8, 32], strides = [1, 1]} : vector<8x96xf32> to vector<8x32xf32>
    %350 = vector.extract_strided_slice %346 {offsets = [0, 32], sizes = [8, 32], strides = [1, 1]} : vector<8x96xf32> to vector<8x32xf32>
    %351 = vector.extract_strided_slice %346 {offsets = [0, 64], sizes = [8, 32], strides = [1, 1]} : vector<8x96xf32> to vector<8x32xf32>
    %352 = arith.mulf %350, %331 : vector<8x32xf32>
    %353 = arith.mulf %349, %348 : vector<8x32xf32>
    %354 = arith.addf %352, %353 : vector<8x32xf32>
    %355 = math.tanh %354 : vector<8x32xf32>
    %356 = arith.mulf %351, %355 : vector<8x32xf32>
    %c6_i32_92 = arith.constant 6 : i32
    %c8_i32_93 = arith.constant 8 : i32
    %357 = arith.muli %c6_i32_92, %c8_i32_93 : i32
    %358 = tpu.assume_multiple %357, 8 : i32
    %359 = arith.index_cast %358 : i32 to index
    %c0_94 = arith.constant 0 : index
    %360 = vector.load %arg10[%359, %c0_94] : memref<64x128xf32, #tpu.memory_space<vmem>>, vector<8x128xf32>
    %361 = arith.truncf %356 : vector<8x32xf32> to vector<8x32xbf16>
    %cst_95 = arith.constant dense<0.000000e+00> : vector<8x128xf32>
    %362 = tpu.matmul %361, %217, %cst_95 {dimension_numbers = #tpu.dot_dimension_numbers<[1], [0], [0], [1], [0, 0, 1, 1], [], []>} : vector<8x32xbf16>, vector<32x128xbf16>, vector<8x128xf32> -> vector<8x128xf32>
    %363 = arith.addf %360, %362 : vector<8x128xf32>
    %364 = vector.extract_strided_slice %363 {offsets = [0, 0], sizes = [8, 96], strides = [1, 1]} : vector<8x128xf32> to vector<8x96xf32>
    %365 = arith.negf %364 : vector<8x96xf32>
    %366 = math.exp %365 : vector<8x96xf32>
    %cst_96 = arith.constant 1.000000e+00 : f32
    %367 = vector.broadcast %cst_96 : f32 to vector<8x96xf32>
    %368 = arith.addf %367, %366 : vector<8x96xf32>
    %369 = arith.divf %367, %368 : vector<8x96xf32>
    %370 = vector.extract_strided_slice %363 {offsets = [0, 96], sizes = [8, 32], strides = [1, 1]} : vector<8x128xf32> to vector<8x32xf32>
    %371 = math.tanh %370 : vector<8x32xf32>
    %372 = vector.extract_strided_slice %369 {offsets = [0, 0], sizes = [8, 32], strides = [1, 1]} : vector<8x96xf32> to vector<8x32xf32>
    %373 = vector.extract_strided_slice %369 {offsets = [0, 32], sizes = [8, 32], strides = [1, 1]} : vector<8x96xf32> to vector<8x32xf32>
    %374 = vector.extract_strided_slice %369 {offsets = [0, 64], sizes = [8, 32], strides = [1, 1]} : vector<8x96xf32> to vector<8x32xf32>
    %375 = arith.mulf %373, %354 : vector<8x32xf32>
    %376 = arith.mulf %372, %371 : vector<8x32xf32>
    %377 = arith.addf %375, %376 : vector<8x32xf32>
    %378 = math.tanh %377 : vector<8x32xf32>
    %379 = arith.mulf %374, %378 : vector<8x32xf32>
    %c7_i32_97 = arith.constant 7 : i32
    %c8_i32_98 = arith.constant 8 : i32
    %380 = arith.muli %c7_i32_97, %c8_i32_98 : i32
    %381 = tpu.assume_multiple %380, 8 : i32
    %382 = arith.index_cast %381 : i32 to index
    %c0_99 = arith.constant 0 : index
    %383 = vector.load %arg10[%382, %c0_99] : memref<64x128xf32, #tpu.memory_space<vmem>>, vector<8x128xf32>
    %384 = arith.truncf %379 : vector<8x32xf32> to vector<8x32xbf16>
    %cst_100 = arith.constant dense<0.000000e+00> : vector<8x128xf32>
    %385 = tpu.matmul %384, %217, %cst_100 {dimension_numbers = #tpu.dot_dimension_numbers<[1], [0], [0], [1], [0, 0, 1, 1], [], []>} : vector<8x32xbf16>, vector<32x128xbf16>, vector<8x128xf32> -> vector<8x128xf32>
    %386 = arith.addf %383, %385 : vector<8x128xf32>
    %387 = vector.extract_strided_slice %386 {offsets = [0, 0], sizes = [8, 96], strides = [1, 1]} : vector<8x128xf32> to vector<8x96xf32>
    %388 = arith.negf %387 : vector<8x96xf32>
    %389 = math.exp %388 : vector<8x96xf32>
    %cst_101 = arith.constant 1.000000e+00 : f32
    %390 = vector.broadcast %cst_101 : f32 to vector<8x96xf32>
    %391 = arith.addf %390, %389 : vector<8x96xf32>
    %392 = arith.divf %390, %391 : vector<8x96xf32>
    %393 = vector.extract_strided_slice %386 {offsets = [0, 96], sizes = [8, 32], strides = [1, 1]} : vector<8x128xf32> to vector<8x32xf32>
    %394 = math.tanh %393 : vector<8x32xf32>
    %395 = vector.extract_strided_slice %392 {offsets = [0, 0], sizes = [8, 32], strides = [1, 1]} : vector<8x96xf32> to vector<8x32xf32>
    %396 = vector.extract_strided_slice %392 {offsets = [0, 32], sizes = [8, 32], strides = [1, 1]} : vector<8x96xf32> to vector<8x32xf32>
    %397 = vector.extract_strided_slice %392 {offsets = [0, 64], sizes = [8, 32], strides = [1, 1]} : vector<8x96xf32> to vector<8x32xf32>
    %398 = arith.mulf %396, %377 : vector<8x32xf32>
    %399 = arith.mulf %395, %394 : vector<8x32xf32>
    %400 = arith.addf %398, %399 : vector<8x32xf32>
    %401 = math.tanh %400 : vector<8x32xf32>
    %402 = arith.mulf %397, %401 : vector<8x32xf32>
    %c8_i32_102 = arith.constant 8 : i32
    %403 = arith.truncf %402 : vector<8x32xf32> to vector<8x32xbf16>
    %c0_103 = arith.constant 0 : index
    %c0_104 = arith.constant 0 : index
    %404 = vector.load %arg7[%c0_103, %c0_104] : memref<32x4xbf16, #tpu.memory_space<vmem>>, vector<32x4xbf16>
    %cst_105 = arith.constant dense<0.000000e+00> : vector<8x4xf32>
    %405 = tpu.matmul %403, %404, %cst_105 {dimension_numbers = #tpu.dot_dimension_numbers<[1], [0], [0], [1], [0, 0, 1, 1], [], []>} : vector<8x32xbf16>, vector<32x4xbf16>, vector<8x4xf32> -> vector<8x4xf32>
    %c0_106 = arith.constant 0 : index
    %c0_107 = arith.constant 0 : index
    %406 = vector.load %arg8[%c0_106, %c0_107] : memref<1x4xf32, #tpu.memory_space<vmem>>, vector<1x4xf32>
    %407 = vector.broadcast %406 : vector<1x4xf32> to vector<8x4xf32>
    %408 = arith.addf %405, %407 : vector<8x4xf32>
    %c0_108 = arith.constant 0 : index
    %c0_109 = arith.constant 0 : index
    %409 = vector.load %arg9[%c0_108, %c0_109] : memref<8x4xf32, #tpu.memory_space<vmem>>, vector<8x4xf32>
    tpu.vector_store %arg9[%c0_108, %c0_109], %408 {strides = array<i32>} : memref<8x4xf32, #tpu.memory_space<vmem>>, vector<8x4xf32>,
    return
  }
}

</mosaic_0001>

<llo_original>
// kernel: lstm_model_forward.1
$region0: #{lstm_model_forward.1}
  #allocation0 [shape = 'u32[]', space=smem, size = 0x4, offset = 0x4, fixed_abs, tag = 'smem constant byte address 0x4 - core index']
  #allocation1 [shape = 'u32[72,128]{1,0:T(1,128)}', space=vmem, size = 0x9000, scoped, tag = 'internal scratch']
  #allocation2 [shape = 'f32[64,128]{1,0:T(8,128)}', space=vmem, size = 0x8000, scoped, tag = 'scratch operand']
  #allocation3 [shape = 'f32[64,32]{1,0:T(8,128)}', space=vmem, size = 0x8000, scoped, tag = 'scratch operand']
  %s0 = inlined_call_operand.vmem [shape: bf16[64,16], index: 0, kind: input, shape index: {}]
  %s1 = inlined_call_operand.vmem [shape: bf16[16,128], index: 1, kind: input, shape index: {}]
  %s2 = inlined_call_operand.vmem [shape: bf16[32,128], index: 2, kind: input, shape index: {}]
  %s3 = inlined_call_operand.vmem [shape: f32[1,128], index: 3, kind: input, shape index: {}]
  %s4 = inlined_call_operand.vmem [shape: bf16[32,128], index: 4, kind: input, shape index: {}]
  %s5 = inlined_call_operand.vmem [shape: bf16[32,128], index: 5, kind: input, shape index: {}]
  %s6 = inlined_call_operand.vmem [shape: f32[1,128], index: 6, kind: input, shape index: {}]
  %s7 = inlined_call_operand.vmem [shape: bf16[32,4], index: 7, kind: input, shape index: {}]
  %s8 = inlined_call_operand.vmem [shape: f32[1,4], index: 8, kind: input, shape index: {}]
  %s9 = inlined_call_operand.vmem [shape: f32[8,4], index: 9, kind: output, shape index: {}]
  %s10 = sld [smem:[#allocation0]]
  $region46: #{lstm_model_forward.1} parent=0
    _
  %s12 = ssub.s32 1, %s10
  %s13 = scalar_select 0, %s12, %s10
  // Predicated region
  $region2: #{lstm_model_forward.1} parent=0 // pred_check
    _
  $region3: #{lstm_model_forward.1} parent=0 // pred_check_branch
    %15 = sbr.rel (0) target = $region5
  $region4: #{lstm_model_forward.1} parent=0 // pred_region
    _
  $region5: #{lstm_model_forward.1} parent=0 // pred_fallthru
    _
  // Predicated region
  $region6: #{lstm_model_forward.1} parent=0 // pred_check
    _
  $region7: #{lstm_model_forward.1} parent=0 // pred_check_branch
    %17 = sbr.rel (0) target = $region9
  $region8: #{lstm_model_forward.1} parent=0 // pred_region
    _
  $region9: #{lstm_model_forward.1} parent=0 // pred_fallthru
    _
  // Predicated region
  $region10: #{lstm_model_forward.1} parent=0 // pred_check
    _
  $region11: #{lstm_model_forward.1} parent=0 // pred_check_branch
    %19 = sbr.rel (0) target = $region13
  $region12: #{lstm_model_forward.1} parent=0 // pred_region
    _
  $region13: #{lstm_model_forward.1} parent=0 // pred_fallthru
    _
  // Predicated region
  $region14: #{lstm_model_forward.1} parent=0 // pred_check
    _
  $region15: #{lstm_model_forward.1} parent=0 // pred_check_branch
    %21 = sbr.rel (0) target = $region17
  $region16: #{lstm_model_forward.1} parent=0 // pred_region
    _
  $region17: #{lstm_model_forward.1} parent=0 // pred_fallthru
    _
  // Predicated region
  $region18: #{lstm_model_forward.1} parent=0 // pred_check
    _
  $region19: #{lstm_model_forward.1} parent=0 // pred_check_branch
    %23 = sbr.rel (0) target = $region21
  $region20: #{lstm_model_forward.1} parent=0 // pred_region
    _
  $region21: #{lstm_model_forward.1} parent=0 // pred_fallthru
    _
  // Predicated region
  $region22: #{lstm_model_forward.1} parent=0 // pred_check
    _
  $region23: #{lstm_model_forward.1} parent=0 // pred_check_branch
    %25 = sbr.rel (0) target = $region25
  $region24: #{lstm_model_forward.1} parent=0 // pred_region
    _
  $region25: #{lstm_model_forward.1} parent=0 // pred_fallthru
    _
  // Predicated region
  $region26: #{lstm_model_forward.1} parent=0 // pred_check
    _
  $region27: #{lstm_model_forward.1} parent=0 // pred_check_branch
    %27 = sbr.rel (0) target = $region29
  $region28: #{lstm_model_forward.1} parent=0 // pred_region
    _
  $region29: #{lstm_model_forward.1} parent=0 // pred_fallthru
    _
  // Predicated region
  $region30: #{lstm_model_forward.1} parent=0 // pred_check
    _
  $region31: #{lstm_model_forward.1} parent=0 // pred_check_branch
    %29 = sbr.rel (0) target = $region33
  $region32: #{lstm_model_forward.1} parent=0 // pred_region
    _
  $region33: #{lstm_model_forward.1} parent=0 // pred_fallthru
    _
  // Predicated region
  $region34: #{lstm_model_forward.1} parent=0 // pred_check
    _
  $region35: #{lstm_model_forward.1} parent=0 // pred_check_branch
    %31 = sbr.rel (0) target = $region37
  $region36: #{lstm_model_forward.1} parent=0 // pred_region
    _
  $region37: #{lstm_model_forward.1} parent=0 // pred_fallthru
    _
  %v33 = vld [vmem:[%s0] sm:$0xf]
  %v34 = vld [vmem:[%s0 + $0x4] sm:$0xf]
  %v35 = vld [vmem:[%s0 + $0x8] sm:$0xf]
  %v36 = vld [vmem:[%s0 + $0xc] sm:$0xf]
  %v37 = vld [vmem:[%s0 + $0x10] sm:$0xf]
  %v38 = vld [vmem:[%s0 + $0x14] sm:$0xf]
  %v39 = vld [vmem:[%s0 + $0x18] sm:$0xf]
  %v40 = vld [vmem:[%s0 + $0x1c] sm:$0xf]
  %v41 = vld [vmem:[%s1] sm:$0xf]
  %v42 = vld [vmem:[%s1 + $0x4] sm:$0xf]
  %v43 = vld [vmem:[%s3] sm:$0x1]
  %v45 = vperm.slane %v43, 0
  %v55 = vunpack.c.l.b16 %v33
  %v56 = vunpack.c.l.b16 %v34
  %v57 = vunpack.c.l.b16 %v35
  %v58 = vunpack.c.l.b16 %v36
  %v59 = vunpack.c.l.b16 %v37
  %v60 = vunpack.c.l.b16 %v38
  %v61 = vunpack.c.l.b16 %v39
  %v62 = vunpack.c.l.b16 %v40
  %v63 = vpack.c.b16 %v56, %v55
  %v64 = vpack.c.b16 %v58, %v57
  %v65 = vpack.c.b16 %v60, %v59
  %v66 = vpack.c.b16 %v62, %v61
  %v69 = vunpack.c.l.b16 %v41
  %v70 = vunpack.c.l.b16 %v42
  %v71 = vpack.c.b16 %v70, %v69
  %vm73 = vcmask 130048
  %v75 = vsel %vm73, %v63, 0
  %v78 = vsel %vm73, %v64, 0
  %v81 = vsel %vm73, %v65, 0
  %v84 = vsel %vm73, %v66, 0
  %86 = vmatpush.bf16.msra.mxu0 0
  %87 = vmatpush.bf16.msra.mxu0 0
  %88 = vmatpush.bf16.msra.mxu0 0
  %89 = vmatpush.bf16.msra.mxu0 0
  %90 = vmatpush.bf16.msra.mxu0 0
  %91 = vmatpush.bf16.msra.mxu0 0
  %92 = vmatpush.bf16.msra.mxu0 0
  %93 = vmatpush.bf16.msra.mxu0 %v71
  %94 = vmatmul.bf16.gmra.mxu0 %v75
  %v95 = vpop.f32.mrf.mxu0
  %v96 = vadd.f32 %v45, %v95
  %v97 = vpop.f32.mrf.mxu0
  %v98 = vadd.f32 %v45, %v97
  %99 = vmatmul.bf16.gmra.mxu0 %v78
  %v100 = vpop.f32.mrf.mxu0
  %v101 = vadd.f32 %v45, %v100
  %v102 = vpop.f32.mrf.mxu0
  %v103 = vadd.f32 %v45, %v102
  %104 = vmatmul.bf16.gmra.mxu0 %v81
  %v105 = vpop.f32.mrf.mxu0
  %v106 = vadd.f32 %v45, %v105
  %v107 = vpop.f32.mrf.mxu0
  %v108 = vadd.f32 %v45, %v107
  %109 = vmatmul.bf16.gmra.mxu0 %v84
  %v110 = vpop.f32.mrf.mxu0
  %v111 = vadd.f32 %v45, %v110
  %v112 = vpop.f32.mrf.mxu0
  %v113 = vadd.f32 %v45, %v112
  %114 = vdwg.mxu0
  %115 = vst [vmem:[#allocation2] sm:$0xff] %v96
  %116 = vst [vmem:[#allocation2 + $0x8] sm:$0xff] %v98
  %117 = vst [vmem:[#allocation2 + $0x10] sm:$0xff] %v101
  %118 = vst [vmem:[#allocation2 + $0x18] sm:$0xff] %v103
  %119 = vst [vmem:[#allocation2 + $0x20] sm:$0xff] %v106
  %120 = vst [vmem:[#allocation2 + $0x28] sm:$0xff] %v108
  %121 = vst [vmem:[#allocation2 + $0x30] sm:$0xff] %v111
  %122 = vst [vmem:[#allocation2 + $0x38] sm:$0xff] %v113
  %v123 = vld [vmem:[%s2] sm:$0xf]
  %v124 = vld [vmem:[%s2 + $0x4] sm:$0xf]
  %v125 = vld [vmem:[%s2 + $0x8] sm:$0xf]
  %v126 = vld [vmem:[%s2 + $0xc] sm:$0xf]
  %v127 = vld [vmem:[#allocation2] sm:$0xff]
  %v132 = vunpack.c.l.b16 %v123
  %v133 = vunpack.c.l.b16 %v124
  %v134 = vunpack.c.l.b16 %v125
  %v135 = vunpack.c.l.b16 %v126
  %v136 = vpack.c.b16 %v133, %v132
  %v137 = vpack.c.b16 %v135, %v134
  %vm140 = vcmask 261120
  %v142 = vsel %vm140, 0, 0
  %144 = vmatpush.bf16.msra.mxu0 0
  %145 = vmatpush.bf16.msra.mxu0 0
  %146 = vmatpush.bf16.msra.mxu0 0
  %147 = vmatpush.bf16.msra.mxu0 0
  %148 = vmatpush.bf16.msra.mxu0 0
  %149 = vmatpush.bf16.msra.mxu0 0
  %150 = vmatpush.bf16.msra.mxu0 %v137
  %151 = vmatpush.bf16.msra.mxu0 %v136
  %152 = vmatmul.bf16.gmra.mxu0 %v142
  %v153 = vpop.f32.mrf.mxu0
  %v154 = vadd.f32 0.0, %v153
  %v155 = vpop.f32.mrf.mxu0
  %156 = vdwg.mxu0
  %v157 = vadd.f32 %v127, %v154
  %v158 = vxor.u32 %v157, 2147483648
  %v159 = vmul.f32 %v158, 1.442695
  %v160 = vpow.pop %v159
  %v161 = vadd.f32 %v160, 1.0
  %v162 = vrcp.pop %v161
  %v163 = vmul.f32 %v161, %v162
  %v164 = vsub.f32 1.0, %v163
  %v165 = vmul.f32 %v162, %v164
  %v166 = vadd.f32 %v162, %v165
  %vm167 = vweird.f32 %v161
  %vm168 = vweird.f32 %v162
  %vm169 = vmor %vm167, %vm168
  %v170 = vsel %vm169, %v162, %v166
  %v171 = vand.u32 2147483647, %v161
  %vm172 = vcmp.eq.f32.partialorder %v171, 8.507059e+37
  %v173 = vand.u32 %v161, 2147483648
  %v174 = vor.u32 1.1754944e-38, %v173
  %v175 = vsel %vm172, %v174, %v170
  %v176 = vmul.f32 1.0, %v175
  %v177 = vtanh.pop %v157
  %v178 = vmul.f32 %v176, 0.0
  %180 = vrot.lane.b32.xlu0 %v177, 32
  %v181 = vpop.permute.xlu0 %180
  %v183 = vmul.f32 %v176, %v181
  %185 = vrot.lane.b32.xlu0 %v183, 32
  %v186 = vpop.permute.xlu0 %185
  %v188 = vadd.f32 %v178, %v186
  %v189 = vtanh.pop %v188
  %191 = vrot.lane.b32.xlu0 %v189, 32
  %v192 = vpop.permute.xlu0 %191
  %v194 = vmul.f32 %v176, %v192
  %196 = vrot.lane.b32.xlu0 %v194, 64
  %v197 = vpop.permute.xlu0 %196
  %199 = vst.msk [vmem:[#allocation3] sm:$0xff] %vm140, %v197
  %s200 = scalar_lea.vmem [#allocation2], 8
  %v201 = vld [vmem:[%s200] sm:$0xff]
  %v202 = vpack.c.bf16 %v194, %v194
  %204 = vrot.lane.b32.xlu0 %v202, 64
  %v205 = vpop.permute.xlu0 %204
  %v207 = vsel %vm140, %v205, 0
  %209 = vmatpush.bf16.msra.mxu0 0
  %210 = vmatpush.bf16.msra.mxu0 0
  %211 = vmatpush.bf16.msra.mxu0 0
  %212 = vmatpush.bf16.msra.mxu0 0
  %213 = vmatpush.bf16.msra.mxu0 0
  %214 = vmatpush.bf16.msra.mxu0 0
  %215 = vmatpush.bf16.msra.mxu0 %v137
  %216 = vmatpush.bf16.msra.mxu0 %v136
  %217 = vmatmul.bf16.gmra.mxu0 %v207
  %v218 = vpop.f32.mrf.mxu0
  %v219 = vadd.f32 0.0, %v218
  %v220 = vpop.f32.mrf.mxu0
  %221 = vdwg.mxu0
  %v222 = vadd.f32 %v201, %v219
  %v223 = vxor.u32 %v222, 2147483648
  %v224 = vmul.f32 %v223, 1.442695
  %v225 = vpow.pop %v224
  %v226 = vadd.f32 %v225, 1.0
  %v227 = vrcp.pop %v226
  %v228 = vmul.f32 %v226, %v227
  %v229 = vsub.f32 1.0, %v228
  %v230 = vmul.f32 %v227, %v229
  %v231 = vadd.f32 %v227, %v230
  %vm232 = vweird.f32 %v226
  %vm233 = vweird.f32 %v227
  %vm234 = vmor %vm232, %vm233
  %v235 = vsel %vm234, %v227, %v231
  %v236 = vand.u32 2147483647, %v226
  %vm237 = vcmp.eq.f32.partialorder %v236, 8.507059e+37
  %v238 = vand.u32 %v226, 2147483648
  %v239 = vor.u32 1.1754944e-38, %v238
  %v240 = vsel %vm237, %v239, %v235
  %v241 = vmul.f32 1.0, %v240
  %v242 = vtanh.pop %v222
  %v243 = vmul.f32 %v241, %v188
  %245 = vrot.lane.b32.xlu0 %v242, 32
  %v246 = vpop.permute.xlu0 %245
  %v248 = vmul.f32 %v241, %v246
  %250 = vrot.lane.b32.xlu0 %v248, 32
  %v251 = vpop.permute.xlu0 %250
  %v253 = vadd.f32 %v243, %v251
  %v254 = vtanh.pop %v253
  %256 = vrot.lane.b32.xlu0 %v254, 32
  %v257 = vpop.permute.xlu0 %256
  %v259 = vmul.f32 %v241, %v257
  %261 = vrot.lane.b32.xlu0 %v259, 64
  %v262 = vpop.permute.xlu0 %261
  %s264 = scalar_lea.vmem [#allocation3], 8
  %265 = vst.msk [vmem:[%s264] sm:$0xff] %vm140, %v262
  %s266 = scalar_lea.vmem [#allocation2], 16
  %v267 = vld [vmem:[%s266] sm:$0xff]
  %v268 = vpack.c.bf16 %v259, %v259
  %270 = vrot.lane.b32.xlu0 %v268, 64
  %v271 = vpop.permute.xlu0 %270
  %v273 = vsel %vm140, %v271, 0
  %275 = vmatpush.bf16.msra.mxu0 0
  %276 = vmatpush.bf16.msra.mxu0 0
  %277 = vmatpush.bf16.msra.mxu0 0
  %278 = vmatpush.bf16.msra.mxu0 0
  %279 = vmatpush.bf16.msra.mxu0 0
  %280 = vmatpush.bf16.msra.mxu0 0
  %281 = vmatpush.bf16.msra.mxu0 %v137
  %282 = vmatpush.bf16.msra.mxu0 %v136
  %283 = vmatmul.bf16.gmra.mxu0 %v273
  %v284 = vpop.f32.mrf.mxu0
  %v285 = vadd.f32 0.0, %v284
  %v286 = vpop.f32.mrf.mxu0
  %287 = vdwg.mxu0
  %v288 = vadd.f32 %v267, %v285
  %v289 = vxor.u32 %v288, 2147483648
  %v290 = vmul.f32 %v289, 1.442695
  %v291 = vpow.pop %v290
  %v292 = vadd.f32 %v291, 1.0
  %v293 = vrcp.pop %v292
  %v294 = vmul.f32 %v292, %v293
  %v295 = vsub.f32 1.0, %v294
  %v296 = vmul.f32 %v293, %v295
  %v297 = vadd.f32 %v293, %v296
  %vm298 = vweird.f32 %v292
  %vm299 = vweird.f32 %v293
  %vm300 = vmor %vm298, %vm299
  %v301 = vsel %vm300, %v293, %v297
  %v302 = vand.u32 2147483647, %v292
  %vm303 = vcmp.eq.f32.partialorder %v302, 8.507059e+37
  %v304 = vand.u32 %v292, 2147483648
  %v305 = vor.u32 1.1754944e-38, %v304
  %v306 = vsel %vm303, %v305, %v301
  %v307 = vmul.f32 1.0, %v306
  %v308 = vtanh.pop %v288
  %v309 = vmul.f32 %v307, %v253
  %311 = vrot.lane.b32.xlu0 %v308, 32
  %v312 = vpop.permute.xlu0 %311
  %v314 = vmul.f32 %v307, %v312
  %316 = vrot.lane.b32.xlu0 %v314, 32
  %v317 = vpop.permute.xlu0 %316
  %v319 = vadd.f32 %v309, %v317
  %v320 = vtanh.pop %v319
  %322 = vrot.lane.b32.xlu0 %v320, 32
  %v323 = vpop.permute.xlu0 %322
  %v325 = vmul.f32 %v307, %v323
  %327 = vrot.lane.b32.xlu0 %v325, 64
  %v328 = vpop.permute.xlu0 %327
  %s330 = scalar_lea.vmem [#allocation3], 16
  %331 = vst.msk [vmem:[%s330] sm:$0xff] %vm140, %v328
  %s332 = scalar_lea.vmem [#allocation2], 24
  %v333 = vld [vmem:[%s332] sm:$0xff]
  %v334 = vpack.c.bf16 %v325, %v325
  %336 = vrot.lane.b32.xlu0 %v334, 64
  %v337 = vpop.permute.xlu0 %336
  %v339 = vsel %vm140, %v337, 0
  %341 = vmatpush.bf16.msra.mxu0 0
  %342 = vmatpush.bf16.msra.mxu0 0
  %343 = vmatpush.bf16.msra.mxu0 0
  %344 = vmatpush.bf16.msra.mxu0 0
  %345 = vmatpush.bf16.msra.mxu0 0
  %346 = vmatpush.bf16.msra.mxu0 0
  %347 = vmatpush.bf16.msra.mxu0 %v137
  %348 = vmatpush.bf16.msra.mxu0 %v136
  %349 = vmatmul.bf16.gmra.mxu0 %v339
  %v350 = vpop.f32.mrf.mxu0
  %v351 = vadd.f32 0.0, %v350
  %v352 = vpop.f32.mrf.mxu0
  %353 = vdwg.mxu0
  %v354 = vadd.f32 %v333, %v351
  %v355 = vxor.u32 %v354, 2147483648
  %v356 = vmul.f32 %v355, 1.442695
  %v357 = vpow.pop %v356
  %v358 = vadd.f32 %v357, 1.0
  %v359 = vrcp.pop %v358
  %v360 = vmul.f32 %v358, %v359
  %v361 = vsub.f32 1.0, %v360
  %v362 = vmul.f32 %v359, %v361
  %v363 = vadd.f32 %v359, %v362
  %vm364 = vweird.f32 %v358
  %vm365 = vweird.f32 %v359
  %vm366 = vmor %vm364, %vm365
  %v367 = vsel %vm366, %v359, %v363
  %v368 = vand.u32 2147483647, %v358
  %vm369 = vcmp.eq.f32.partialorder %v368, 8.507059e+37
  %v370 = vand.u32 %v358, 2147483648
  %v371 = vor.u32 1.1754944e-38, %v370
  %v372 = vsel %vm369, %v371, %v367
  %v373 = vmul.f32 1.0, %v372
  %v374 = vtanh.pop %v354
  %v375 = vmul.f32 %v373, %v319
  %377 = vrot.lane.b32.xlu0 %v374, 32
  %v378 = vpop.permute.xlu0 %377
  %v380 = vmul.f32 %v373, %v378
  %382 = vrot.lane.b32.xlu0 %v380, 32
  %v383 = vpop.permute.xlu0 %382
  %v385 = vadd.f32 %v375, %v383
  %v386 = vtanh.pop %v385
  %388 = vrot.lane.b32.xlu0 %v386, 32
  %v389 = vpop.permute.xlu0 %388
  %v391 = vmul.f32 %v373, %v389
  %393 = vrot.lane.b32.xlu0 %v391, 64
  %v394 = vpop.permute.xlu0 %393
  %s396 = scalar_lea.vmem [#allocation3], 24
  %397 = vst.msk [vmem:[%s396] sm:$0xff] %vm140, %v394
  %s398 = scalar_lea.vmem [#allocation2], 32
  %v399 = vld [vmem:[%s398] sm:$0xff]
  %v400 = vpack.c.bf16 %v391, %v391
  %402 = vrot.lane.b32.xlu0 %v400, 64
  %v403 = vpop.permute.xlu0 %402
  %v405 = vsel %vm140, %v403, 0
  %407 = vmatpush.bf16.msra.mxu0 0
  %408 = vmatpush.bf16.msra.mxu0 0
  %409 = vmatpush.bf16.msra.mxu0 0
  %410 = vmatpush.bf16.msra.mxu0 0
  %411 = vmatpush.bf16.msra.mxu0 0
  %412 = vmatpush.bf16.msra.mxu0 0
  %413 = vmatpush.bf16.msra.mxu0 %v137
  %414 = vmatpush.bf16.msra.mxu0 %v136
  %415 = vmatmul.bf16.gmra.mxu0 %v405
  %v416 = vpop.f32.mrf.mxu0
  %v417 = vadd.f32 0.0, %v416
  %v418 = vpop.f32.mrf.mxu0
  %419 = vdwg.mxu0
  %v420 = vadd.f32 %v399, %v417
  %v421 = vxor.u32 %v420, 2147483648
  %v422 = vmul.f32 %v421, 1.442695
  %v423 = vpow.pop %v422
  %v424 = vadd.f32 %v423, 1.0
  %v425 = vrcp.pop %v424
  %v426 = vmul.f32 %v424, %v425
  %v427 = vsub.f32 1.0, %v426
  %v428 = vmul.f32 %v425, %v427
  %v429 = vadd.f32 %v425, %v428
  %vm430 = vweird.f32 %v424
  %vm431 = vweird.f32 %v425
  %vm432 = vmor %vm430, %vm431
  %v433 = vsel %vm432, %v425, %v429
  %v434 = vand.u32 2147483647, %v424
  %vm435 = vcmp.eq.f32.partialorder %v434, 8.507059e+37
  %v436 = vand.u32 %v424, 2147483648
  %v437 = vor.u32 1.1754944e-38, %v436
  %v438 = vsel %vm435, %v437, %v433
  %v439 = vmul.f32 1.0, %v438
  %v440 = vtanh.pop %v420
  %v441 = vmul.f32 %v439, %v385
  %443 = vrot.lane.b32.xlu0 %v440, 32
  %v444 = vpop.permute.xlu0 %443
  %v446 = vmul.f32 %v439, %v444
  %448 = vrot.lane.b32.xlu0 %v446, 32
  %v449 = vpop.permute.xlu0 %448
  %v451 = vadd.f32 %v441, %v449
  %v452 = vtanh.pop %v451
  %454 = vrot.lane.b32.xlu0 %v452, 32
  %v455 = vpop.permute.xlu0 %454
  %v457 = vmul.f32 %v439, %v455
  %459 = vrot.lane.b32.xlu0 %v457, 64
  %v460 = vpop.permute.xlu0 %459
  %s462 = scalar_lea.vmem [#allocation3], 32
  %463 = vst.msk [vmem:[%s462] sm:$0xff] %vm140, %v460
  %s464 = scalar_lea.vmem [#allocation2], 40
  %v465 = vld [vmem:[%s464] sm:$0xff]
  %v466 = vpack.c.bf16 %v457, %v457
  %468 = vrot.lane.b32.xlu0 %v466, 64
  %v469 = vpop.permute.xlu0 %468
  %v471 = vsel %vm140, %v469, 0
  %473 = vmatpush.bf16.msra.mxu0 0
  %474 = vmatpush.bf16.msra.mxu0 0
  %475 = vmatpush.bf16.msra.mxu0 0
  %476 = vmatpush.bf16.msra.mxu0 0
  %477 = vmatpush.bf16.msra.mxu0 0
  %478 = vmatpush.bf16.msra.mxu0 0
  %479 = vmatpush.bf16.msra.mxu0 %v137
  %480 = vmatpush.bf16.msra.mxu0 %v136
  %481 = vmatmul.bf16.gmra.mxu0 %v471
  %v482 = vpop.f32.mrf.mxu0
  %v483 = vadd.f32 0.0, %v482
  %v484 = vpop.f32.mrf.mxu0
  %485 = vdwg.mxu0
  %v486 = vadd.f32 %v465, %v483
  %v487 = vxor.u32 %v486, 2147483648
  %v488 = vmul.f32 %v487, 1.442695
  %v489 = vpow.pop %v488
  %v490 = vadd.f32 %v489, 1.0
  %v491 = vrcp.pop %v490
  %v492 = vmul.f32 %v490, %v491
  %v493 = vsub.f32 1.0, %v492
  %v494 = vmul.f32 %v491, %v493
  %v495 = vadd.f32 %v491, %v494
  %vm496 = vweird.f32 %v490
  %vm497 = vweird.f32 %v491
  %vm498 = vmor %vm496, %vm497
  %v499 = vsel %vm498, %v491, %v495
  %v500 = vand.u32 2147483647, %v490
  %vm501 = vcmp.eq.f32.partialorder %v500, 8.507059e+37
  %v502 = vand.u32 %v490, 2147483648
  %v503 = vor.u32 1.1754944e-38, %v502
  %v504 = vsel %vm501, %v503, %v499
  %v505 = vmul.f32 1.0, %v504
  %v506 = vtanh.pop %v486
  %v507 = vmul.f32 %v505, %v451
  %509 = vrot.lane.b32.xlu0 %v506, 32
  %v510 = vpop.permute.xlu0 %509
  %v512 = vmul.f32 %v505, %v510
  %514 = vrot.lane.b32.xlu0 %v512, 32
  %v515 = vpop.permute.xlu0 %514
  %v517 = vadd.f32 %v507, %v515
  %v518 = vtanh.pop %v517
  %520 = vrot.lane.b32.xlu0 %v518, 32
  %v521 = vpop.permute.xlu0 %520
  %v523 = vmul.f32 %v505, %v521
  %525 = vrot.lane.b32.xlu0 %v523, 64
  %v526 = vpop.permute.xlu0 %525
  %s528 = scalar_lea.vmem [#allocation3], 40
  %529 = vst.msk [vmem:[%s528] sm:$0xff] %vm140, %v526
  %s530 = scalar_lea.vmem [#allocation2], 48
  %v531 = vld [vmem:[%s530] sm:$0xff]
  %v532 = vpack.c.bf16 %v523, %v523
  %534 = vrot.lane.b32.xlu0 %v532, 64
  %v535 = vpop.permute.xlu0 %534
  %v537 = vsel %vm140, %v535, 0
  %539 = vmatpush.bf16.msra.mxu0 0
  %540 = vmatpush.bf16.msra.mxu0 0
  %541 = vmatpush.bf16.msra.mxu0 0
  %542 = vmatpush.bf16.msra.mxu0 0
  %543 = vmatpush.bf16.msra.mxu0 0
  %544 = vmatpush.bf16.msra.mxu0 0
  %545 = vmatpush.bf16.msra.mxu0 %v137
  %546 = vmatpush.bf16.msra.mxu0 %v136
  %547 = vmatmul.bf16.gmra.mxu0 %v537
  %v548 = vpop.f32.mrf.mxu0
  %v549 = vadd.f32 0.0, %v548
  %v550 = vpop.f32.mrf.mxu0
  %551 = vdwg.mxu0
  %v552 = vadd.f32 %v531, %v549
  %v553 = vxor.u32 %v552, 2147483648
  %v554 = vmul.f32 %v553, 1.442695
  %v555 = vpow.pop %v554
  %v556 = vadd.f32 %v555, 1.0
  %v557 = vrcp.pop %v556
  %v558 = vmul.f32 %v556, %v557
  %v559 = vsub.f32 1.0, %v558
  %v560 = vmul.f32 %v557, %v559
  %v561 = vadd.f32 %v557, %v560
  %vm562 = vweird.f32 %v556
  %vm563 = vweird.f32 %v557
  %vm564 = vmor %vm562, %vm563
  %v565 = vsel %vm564, %v557, %v561
  %v566 = vand.u32 2147483647, %v556
  %vm567 = vcmp.eq.f32.partialorder %v566, 8.507059e+37
  %v568 = vand.u32 %v556, 2147483648
  %v569 = vor.u32 1.1754944e-38, %v568
  %v570 = vsel %vm567, %v569, %v565
  %v571 = vmul.f32 1.0, %v570
  %v572 = vtanh.pop %v552
  %v573 = vmul.f32 %v571, %v517
  %575 = vrot.lane.b32.xlu0 %v572, 32
  %v576 = vpop.permute.xlu0 %575
  %v578 = vmul.f32 %v571, %v576
  %580 = vrot.lane.b32.xlu0 %v578, 32
  %v581 = vpop.permute.xlu0 %580
  %v583 = vadd.f32 %v573, %v581
  %v584 = vtanh.pop %v583
  %586 = vrot.lane.b32.xlu0 %v584, 32
  %v587 = vpop.permute.xlu0 %586
  %v589 = vmul.f32 %v571, %v587
  %591 = vrot.lane.b32.xlu0 %v589, 64
  %v592 = vpop.permute.xlu0 %591
  %s594 = scalar_lea.vmem [#allocation3], 48
  %595 = vst.msk [vmem:[%s594] sm:$0xff] %vm140, %v592
  %s596 = scalar_lea.vmem [#allocation2], 56
  %v597 = vld [vmem:[%s596] sm:$0xff]
  %v598 = vpack.c.bf16 %v589, %v589
  %600 = vrot.lane.b32.xlu0 %v598, 64
  %v601 = vpop.permute.xlu0 %600
  %v603 = vsel %vm140, %v601, 0
  %605 = vmatpush.bf16.msra.mxu0 0
  %606 = vmatpush.bf16.msra.mxu0 0
  %607 = vmatpush.bf16.msra.mxu0 0
  %608 = vmatpush.bf16.msra.mxu0 0
  %609 = vmatpush.bf16.msra.mxu0 0
  %610 = vmatpush.bf16.msra.mxu0 0
  %611 = vmatpush.bf16.msra.mxu0 %v137
  %612 = vmatpush.bf16.msra.mxu0 %v136
  %613 = vmatmul.bf16.gmra.mxu0 %v603
  %v614 = vpop.f32.mrf.mxu0
  %v615 = vadd.f32 0.0, %v614
  %v616 = vpop.f32.mrf.mxu0
  %617 = vdwg.mxu0
  %v618 = vadd.f32 %v597, %v615
  %v619 = vxor.u32 %v618, 2147483648
  %v620 = vmul.f32 %v619, 1.442695
  %v621 = vpow.pop %v620
  %v622 = vadd.f32 %v621, 1.0
  %v623 = vrcp.pop %v622
  %v624 = vmul.f32 %v622, %v623
  %v625 = vsub.f32 1.0, %v624
  %v626 = vmul.f32 %v623, %v625
  %v627 = vadd.f32 %v623, %v626
  %vm628 = vweird.f32 %v622
  %vm629 = vweird.f32 %v623
  %vm630 = vmor %vm628, %vm629
  %v631 = vsel %vm630, %v623, %v627
  %v632 = vand.u32 2147483647, %v622
  %vm633 = vcmp.eq.f32.partialorder %v632, 8.507059e+37
  %v634 = vand.u32 %v622, 2147483648
  %v635 = vor.u32 1.1754944e-38, %v634
  %v636 = vsel %vm633, %v635, %v631
  %v637 = vmul.f32 1.0, %v636
  %v638 = vtanh.pop %v618
  %v639 = vmul.f32 %v637, %v583
  %641 = vrot.lane.b32.xlu0 %v638, 32
  %v642 = vpop.permute.xlu0 %641
  %v644 = vmul.f32 %v637, %v642
  %646 = vrot.lane.b32.xlu0 %v644, 32
  %v647 = vpop.permute.xlu0 %646
  %v649 = vadd.f32 %v639, %v647
  %v650 = vtanh.pop %v649
  %652 = vrot.lane.b32.xlu0 %v650, 32
  %v653 = vpop.permute.xlu0 %652
  %v655 = vmul.f32 %v637, %v653
  %657 = vrot.lane.b32.xlu0 %v655, 64
  %v658 = vpop.permute.xlu0 %657
  %s660 = scalar_lea.vmem [#allocation3], 56
  %661 = vst.msk [vmem:[%s660] sm:$0xff] %vm140, %v658
  %v662 = vld [vmem:[#allocation3] sm:$0xff]
  %v663 = vld [vmem:[#allocation3 + $0x8] sm:$0xff]
  %v664 = vld [vmem:[#allocation3 + $0x10] sm:$0xff]
  %v665 = vld [vmem:[#allocation3 + $0x18] sm:$0xff]
  %v666 = vld [vmem:[#allocation3 + $0x20] sm:$0xff]
  %v667 = vld [vmem:[#allocation3 + $0x28] sm:$0xff]
  %v668 = vld [vmem:[#allocation3 + $0x30] sm:$0xff]
  %v669 = vld [vmem:[#allocation3 + $0x38] sm:$0xff]
  %v670 = vpack.c.bf16 %v663, %v662
  %v671 = vpack.c.bf16 %v665, %v664
  %v672 = vpack.c.bf16 %v667, %v666
  %v673 = vpack.c.bf16 %v669, %v668
  %v674 = vld [vmem:[%s4] sm:$0xf]
  %v675 = vld [vmem:[%s4 + $0x4] sm:$0xf]
  %v676 = vld [vmem:[%s4 + $0x8] sm:$0xf]
  %v677 = vld [vmem:[%s4 + $0xc] sm:$0xf]
  %v678 = vld [vmem:[%s6] sm:$0x1]
  %v680 = vperm.slane %v678, 0
  %v686 = vunpack.c.l.b16 %v674
  %v687 = vunpack.c.l.b16 %v675
  %v688 = vunpack.c.l.b16 %v676
  %v689 = vunpack.c.l.b16 %v677
  %v690 = vpack.c.b16 %v687, %v686
  %v691 = vpack.c.b16 %v689, %v688
  %v695 = vsel %vm140, %v670, 0
  %v698 = vsel %vm140, %v671, 0
  %v701 = vsel %vm140, %v672, 0
  %v704 = vsel %vm140, %v673, 0
  %706 = vmatpush.bf16.msra.mxu0 0
  %707 = vmatpush.bf16.msra.mxu0 0
  %708 = vmatpush.bf16.msra.mxu0 0
  %709 = vmatpush.bf16.msra.mxu0 0
  %710 = vmatpush.bf16.msra.mxu0 0
  %711 = vmatpush.bf16.msra.mxu0 0
  %712 = vmatpush.bf16.msra.mxu0 %v691
  %713 = vmatpush.bf16.msra.mxu0 %v690
  %714 = vmatmul.bf16.gmra.mxu0 %v695
  %v715 = vpop.f32.mrf.mxu0
  %v716 = vadd.f32 %v680, %v715
  %v717 = vpop.f32.mrf.mxu0
  %v718 = vadd.f32 %v680, %v717
  %719 = vmatmul.bf16.gmra.mxu0 %v698
  %v720 = vpop.f32.mrf.mxu0
  %v721 = vadd.f32 %v680, %v720
  %v722 = vpop.f32.mrf.mxu0
  %v723 = vadd.f32 %v680, %v722
  %724 = vmatmul.bf16.gmra.mxu0 %v701
  %v725 = vpop.f32.mrf.mxu0
  %v726 = vadd.f32 %v680, %v725
  %v727 = vpop.f32.mrf.mxu0
  %v728 = vadd.f32 %v680, %v727
  %729 = vmatmul.bf16.gmra.mxu0 %v704
  %v730 = vpop.f32.mrf.mxu0
  %v731 = vadd.f32 %v680, %v730
  %v732 = vpop.f32.mrf.mxu0
  %v733 = vadd.f32 %v680, %v732
  %734 = vdwg.mxu0
  %735 = vst [vmem:[#allocation2] sm:$0xff] %v716
  %736 = vst [vmem:[#allocation2 + $0x8] sm:$0xff] %v718
  %737 = vst [vmem:[#allocation2 + $0x10] sm:$0xff] %v721
  %738 = vst [vmem:[#allocation2 + $0x18] sm:$0xff] %v723
  %739 = vst [vmem:[#allocation2 + $0x20] sm:$0xff] %v726
  %740 = vst [vmem:[#allocation2 + $0x28] sm:$0xff] %v728
  %741 = vst [vmem:[#allocation2 + $0x30] sm:$0xff] %v731
  %742 = vst [vmem:[#allocation2 + $0x38] sm:$0xff] %v733
  %v743 = vld [vmem:[%s5] sm:$0xf]
  %v744 = vld [vmem:[%s5 + $0x4] sm:$0xf]
  %v745 = vld [vmem:[%s5 + $0x8] sm:$0xf]
  %v746 = vld [vmem:[%s5 + $0xc] sm:$0xf]
  %v747 = vld [vmem:[#allocation2] sm:$0xff]
  %v752 = vunpack.c.l.b16 %v743
  %v753 = vunpack.c.l.b16 %v744
  %v754 = vunpack.c.l.b16 %v745
  %v755 = vunpack.c.l.b16 %v746
  %v756 = vpack.c.b16 %v753, %v752
  %v757 = vpack.c.b16 %v755, %v754
  %760 = vmatpush.bf16.msra.mxu0 0
  %761 = vmatpush.bf16.msra.mxu0 0
  %762 = vmatpush.bf16.msra.mxu0 0
  %763 = vmatpush.bf16.msra.mxu0 0
  %764 = vmatpush.bf16.msra.mxu0 0
  %765 = vmatpush.bf16.msra.mxu0 0
  %766 = vmatpush.bf16.msra.mxu0 %v757
  %767 = vmatpush.bf16.msra.mxu0 %v756
  %768 = vmatmul.bf16.gmra.mxu0 %v142
  %v769 = vpop.f32.mrf.mxu0
  %v770 = vadd.f32 0.0, %v769
  %v771 = vpop.f32.mrf.mxu0
  %772 = vdwg.mxu0
  %v773 = vadd.f32 %v747, %v770
  %v774 = vxor.u32 %v773, 2147483648
  %v775 = vmul.f32 %v774, 1.442695
  %v776 = vpow.pop %v775
  %v777 = vadd.f32 %v776, 1.0
  %v778 = vrcp.pop %v777
  %v779 = vmul.f32 %v777, %v778
  %v780 = vsub.f32 1.0, %v779
  %v781 = vmul.f32 %v778, %v780
  %v782 = vadd.f32 %v778, %v781
  %vm783 = vweird.f32 %v777
  %vm784 = vweird.f32 %v778
  %vm785 = vmor %vm783, %vm784
  %v786 = vsel %vm785, %v778, %v782
  %v787 = vand.u32 2147483647, %v777
  %vm788 = vcmp.eq.f32.partialorder %v787, 8.507059e+37
  %v789 = vand.u32 %v777, 2147483648
  %v790 = vor.u32 1.1754944e-38, %v789
  %v791 = vsel %vm788, %v790, %v786
  %v792 = vmul.f32 1.0, %v791
  %v793 = vtanh.pop %v773
  %v794 = vmul.f32 %v792, 0.0
  %796 = vrot.lane.b32.xlu0 %v793, 32
  %v797 = vpop.permute.xlu0 %796
  %v799 = vmul.f32 %v792, %v797
  %801 = vrot.lane.b32.xlu0 %v799, 32
  %v802 = vpop.permute.xlu0 %801
  %v804 = vadd.f32 %v794, %v802
  %v805 = vtanh.pop %v804
  %807 = vrot.lane.b32.xlu0 %v805, 32
  %v808 = vpop.permute.xlu0 %807
  %v810 = vmul.f32 %v792, %v808
  %v811 = vld [vmem:[%s200] sm:$0xff]
  %v812 = vpack.c.bf16 %v810, %v810
  %814 = vrot.lane.b32.xlu0 %v812, 64
  %v815 = vpop.permute.xlu0 %814
  %v817 = vsel %vm140, %v815, 0
  %819 = vmatpush.bf16.msra.mxu0 0
  %820 = vmatpush.bf16.msra.mxu0 0
  %821 = vmatpush.bf16.msra.mxu0 0
  %822 = vmatpush.bf16.msra.mxu0 0
  %823 = vmatpush.bf16.msra.mxu0 0
  %824 = vmatpush.bf16.msra.mxu0 0
  %825 = vmatpush.bf16.msra.mxu0 %v757
  %826 = vmatpush.bf16.msra.mxu0 %v756
  %827 = vmatmul.bf16.gmra.mxu0 %v817
  %v828 = vpop.f32.mrf.mxu0
  %v829 = vadd.f32 0.0, %v828
  %v830 = vpop.f32.mrf.mxu0
  %831 = vdwg.mxu0
  %v832 = vadd.f32 %v811, %v829
  %v833 = vxor.u32 %v832, 2147483648
  %v834 = vmul.f32 %v833, 1.442695
  %v835 = vpow.pop %v834
  %v836 = vadd.f32 %v835, 1.0
  %v837 = vrcp.pop %v836
  %v838 = vmul.f32 %v836, %v837
  %v839 = vsub.f32 1.0, %v838
  %v840 = vmul.f32 %v837, %v839
  %v841 = vadd.f32 %v837, %v840
  %vm842 = vweird.f32 %v836
  %vm843 = vweird.f32 %v837
  %vm844 = vmor %vm842, %vm843
  %v845 = vsel %vm844, %v837, %v841
  %v846 = vand.u32 2147483647, %v836
  %vm847 = vcmp.eq.f32.partialorder %v846, 8.507059e+37
  %v848 = vand.u32 %v836, 2147483648
  %v849 = vor.u32 1.1754944e-38, %v848
  %v850 = vsel %vm847, %v849, %v845
  %v851 = vmul.f32 1.0, %v850
  %v852 = vtanh.pop %v832
  %v853 = vmul.f32 %v851, %v804
  %855 = vrot.lane.b32.xlu0 %v852, 32
  %v856 = vpop.permute.xlu0 %855
  %v858 = vmul.f32 %v851, %v856
  %860 = vrot.lane.b32.xlu0 %v858, 32
  %v861 = vpop.permute.xlu0 %860
  %v863 = vadd.f32 %v853, %v861
  %v864 = vtanh.pop %v863
  %866 = vrot.lane.b32.xlu0 %v864, 32
  %v867 = vpop.permute.xlu0 %866
  %v869 = vmul.f32 %v851, %v867
  %v870 = vld [vmem:[%s266] sm:$0xff]
  %v871 = vpack.c.bf16 %v869, %v869
  %873 = vrot.lane.b32.xlu0 %v871, 64
  %v874 = vpop.permute.xlu0 %873
  %v876 = vsel %vm140, %v874, 0
  %878 = vmatpush.bf16.msra.mxu0 0
  %879 = vmatpush.bf16.msra.mxu0 0
  %880 = vmatpush.bf16.msra.mxu0 0
  %881 = vmatpush.bf16.msra.mxu0 0
  %882 = vmatpush.bf16.msra.mxu0 0
  %883 = vmatpush.bf16.msra.mxu0 0
  %884 = vmatpush.bf16.msra.mxu0 %v757
  %885 = vmatpush.bf16.msra.mxu0 %v756
  %886 = vmatmul.bf16.gmra.mxu0 %v876
  %v887 = vpop.f32.mrf.mxu0
  %v888 = vadd.f32 0.0, %v887
  %v889 = vpop.f32.mrf.mxu0
  %890 = vdwg.mxu0
  %v891 = vadd.f32 %v870, %v888
  %v892 = vxor.u32 %v891, 2147483648
  %v893 = vmul.f32 %v892, 1.442695
  %v894 = vpow.pop %v893
  %v895 = vadd.f32 %v894, 1.0
  %v896 = vrcp.pop %v895
  %v897 = vmul.f32 %v895, %v896
  %v898 = vsub.f32 1.0, %v897
  %v899 = vmul.f32 %v896, %v898
  %v900 = vadd.f32 %v896, %v899
  %vm901 = vweird.f32 %v895
  %vm902 = vweird.f32 %v896
  %vm903 = vmor %vm901, %vm902
  %v904 = vsel %vm903, %v896, %v900
  %v905 = vand.u32 2147483647, %v895
  %vm906 = vcmp.eq.f32.partialorder %v905, 8.507059e+37
  %v907 = vand.u32 %v895, 2147483648
  %v908 = vor.u32 1.1754944e-38, %v907
  %v909 = vsel %vm906, %v908, %v904
  %v910 = vmul.f32 1.0, %v909
  %v911 = vtanh.pop %v891
  %v912 = vmul.f32 %v910, %v863
  %914 = vrot.lane.b32.xlu0 %v911, 32
  %v915 = vpop.permute.xlu0 %914
  %v917 = vmul.f32 %v910, %v915
  %919 = vrot.lane.b32.xlu0 %v917, 32
  %v920 = vpop.permute.xlu0 %919
  %v922 = vadd.f32 %v912, %v920
  %v923 = vtanh.pop %v922
  %925 = vrot.lane.b32.xlu0 %v923, 32
  %v926 = vpop.permute.xlu0 %925
  %v928 = vmul.f32 %v910, %v926
  %v929 = vld [vmem:[%s332] sm:$0xff]
  %v930 = vpack.c.bf16 %v928, %v928
  %932 = vrot.lane.b32.xlu0 %v930, 64
  %v933 = vpop.permute.xlu0 %932
  %v935 = vsel %vm140, %v933, 0
  %937 = vmatpush.bf16.msra.mxu0 0
  %938 = vmatpush.bf16.msra.mxu0 0
  %939 = vmatpush.bf16.msra.mxu0 0
  %940 = vmatpush.bf16.msra.mxu0 0
  %941 = vmatpush.bf16.msra.mxu0 0
  %942 = vmatpush.bf16.msra.mxu0 0
  %943 = vmatpush.bf16.msra.mxu0 %v757
  %944 = vmatpush.bf16.msra.mxu0 %v756
  %945 = vmatmul.bf16.gmra.mxu0 %v935
  %v946 = vpop.f32.mrf.mxu0
  %v947 = vadd.f32 0.0, %v946
  %v948 = vpop.f32.mrf.mxu0
  %949 = vdwg.mxu0
  %v950 = vadd.f32 %v929, %v947
  %v951 = vxor.u32 %v950, 2147483648
  %v952 = vmul.f32 %v951, 1.442695
  %v953 = vpow.pop %v952
  %v954 = vadd.f32 %v953, 1.0
  %v955 = vrcp.pop %v954
  %v956 = vmul.f32 %v954, %v955
  %v957 = vsub.f32 1.0, %v956
  %v958 = vmul.f32 %v955, %v957
  %v959 = vadd.f32 %v955, %v958
  %vm960 = vweird.f32 %v954
  %vm961 = vweird.f32 %v955
  %vm962 = vmor %vm960, %vm961
  %v963 = vsel %vm962, %v955, %v959
  %v964 = vand.u32 2147483647, %v954
  %vm965 = vcmp.eq.f32.partialorder %v964, 8.507059e+37
  %v966 = vand.u32 %v954, 2147483648
  %v967 = vor.u32 1.1754944e-38, %v966
  %v968 = vsel %vm965, %v967, %v963
  %v969 = vmul.f32 1.0, %v968
  %v970 = vtanh.pop %v950
  %v971 = vmul.f32 %v969, %v922
  %973 = vrot.lane.b32.xlu0 %v970, 32
  %v974 = vpop.permute.xlu0 %973
  %v976 = vmul.f32 %v969, %v974
  %978 = vrot.lane.b32.xlu0 %v976, 32
  %v979 = vpop.permute.xlu0 %978
  %v981 = vadd.f32 %v971, %v979
  %v982 = vtanh.pop %v981
  %984 = vrot.lane.b32.xlu0 %v982, 32
  %v985 = vpop.permute.xlu0 %984
  %v987 = vmul.f32 %v969, %v985
  %v988 = vld [vmem:[%s398] sm:$0xff]
  %v989 = vpack.c.bf16 %v987, %v987
  %991 = vrot.lane.b32.xlu0 %v989, 64
  %v992 = vpop.permute.xlu0 %991
  %v994 = vsel %vm140, %v992, 0
  %996 = vmatpush.bf16.msra.mxu0 0
  %997 = vmatpush.bf16.msra.mxu0 0
  %998 = vmatpush.bf16.msra.mxu0 0
  %999 = vmatpush.bf16.msra.mxu0 0
  %1000 = vmatpush.bf16.msra.mxu0 0
  %1001 = vmatpush.bf16.msra.mxu0 0
  %1002 = vmatpush.bf16.msra.mxu0 %v757
  %1003 = vmatpush.bf16.msra.mxu0 %v756
  %1004 = vmatmul.bf16.gmra.mxu0 %v994
  %v1005 = vpop.f32.mrf.mxu0
  %v1006 = vadd.f32 0.0, %v1005
  %v1007 = vpop.f32.mrf.mxu0
  %1008 = vdwg.mxu0
  %v1009 = vadd.f32 %v988, %v1006
  %v1010 = vxor.u32 %v1009, 2147483648
  %v1011 = vmul.f32 %v1010, 1.442695
  %v1012 = vpow.pop %v1011
  %v1013 = vadd.f32 %v1012, 1.0
  %v1014 = vrcp.pop %v1013
  %v1015 = vmul.f32 %v1013, %v1014
  %v1016 = vsub.f32 1.0, %v1015
  %v1017 = vmul.f32 %v1014, %v1016
  %v1018 = vadd.f32 %v1014, %v1017
  %vm1019 = vweird.f32 %v1013
  %vm1020 = vweird.f32 %v1014
  %vm1021 = vmor %vm1019, %vm1020
  %v1022 = vsel %vm1021, %v1014, %v1018
  %v1023 = vand.u32 2147483647, %v1013
  %vm1024 = vcmp.eq.f32.partialorder %v1023, 8.507059e+37
  %v1025 = vand.u32 %v1013, 2147483648
  %v1026 = vor.u32 1.1754944e-38, %v1025
  %v1027 = vsel %vm1024, %v1026, %v1022
  %v1028 = vmul.f32 1.0, %v1027
  %v1029 = vtanh.pop %v1009
  %v1030 = vmul.f32 %v1028, %v981
  %1032 = vrot.lane.b32.xlu0 %v1029, 32
  %v1033 = vpop.permute.xlu0 %1032
  %v1035 = vmul.f32 %v1028, %v1033
  %1037 = vrot.lane.b32.xlu0 %v1035, 32
  %v1038 = vpop.permute.xlu0 %1037
  %v1040 = vadd.f32 %v1030, %v1038
  %v1041 = vtanh.pop %v1040
  %1043 = vrot.lane.b32.xlu0 %v1041, 32
  %v1044 = vpop.permute.xlu0 %1043
  %v1046 = vmul.f32 %v1028, %v1044
  %v1047 = vld [vmem:[%s464] sm:$0xff]
  %v1048 = vpack.c.bf16 %v1046, %v1046
  %1050 = vrot.lane.b32.xlu0 %v1048, 64
  %v1051 = vpop.permute.xlu0 %1050
  %v1053 = vsel %vm140, %v1051, 0
  %1055 = vmatpush.bf16.msra.mxu0 0
  %1056 = vmatpush.bf16.msra.mxu0 0
  %1057 = vmatpush.bf16.msra.mxu0 0
  %1058 = vmatpush.bf16.msra.mxu0 0
  %1059 = vmatpush.bf16.msra.mxu0 0
  %1060 = vmatpush.bf16.msra.mxu0 0
  %1061 = vmatpush.bf16.msra.mxu0 %v757
  %1062 = vmatpush.bf16.msra.mxu0 %v756
  %1063 = vmatmul.bf16.gmra.mxu0 %v1053
  %v1064 = vpop.f32.mrf.mxu0
  %v1065 = vadd.f32 0.0, %v1064
  %v1066 = vpop.f32.mrf.mxu0
  %1067 = vdwg.mxu0
  %v1068 = vadd.f32 %v1047, %v1065
  %v1069 = vxor.u32 %v1068, 2147483648
  %v1070 = vmul.f32 %v1069, 1.442695
  %v1071 = vpow.pop %v1070
  %v1072 = vadd.f32 %v1071, 1.0
  %v1073 = vrcp.pop %v1072
  %v1074 = vmul.f32 %v1072, %v1073
  %v1075 = vsub.f32 1.0, %v1074
  %v1076 = vmul.f32 %v1073, %v1075
  %v1077 = vadd.f32 %v1073, %v1076
  %vm1078 = vweird.f32 %v1072
  %vm1079 = vweird.f32 %v1073
  %vm1080 = vmor %vm1078, %vm1079
  %v1081 = vsel %vm1080, %v1073, %v1077
  %v1082 = vand.u32 2147483647, %v1072
  %vm1083 = vcmp.eq.f32.partialorder %v1082, 8.507059e+37
  %v1084 = vand.u32 %v1072, 2147483648
  %v1085 = vor.u32 1.1754944e-38, %v1084
  %v1086 = vsel %vm1083, %v1085, %v1081
  %v1087 = vmul.f32 1.0, %v1086
  %v1088 = vtanh.pop %v1068
  %v1089 = vmul.f32 %v1087, %v1040
  %1091 = vrot.lane.b32.xlu0 %v1088, 32
  %v1092 = vpop.permute.xlu0 %1091
  %v1094 = vmul.f32 %v1087, %v1092
  %1096 = vrot.lane.b32.xlu0 %v1094, 32
  %v1097 = vpop.permute.xlu0 %1096
  %v1099 = vadd.f32 %v1089, %v1097
  %v1100 = vtanh.pop %v1099
  %1102 = vrot.lane.b32.xlu0 %v1100, 32
  %v1103 = vpop.permute.xlu0 %1102
  %v1105 = vmul.f32 %v1087, %v1103
  %v1106 = vld [vmem:[%s530] sm:$0xff]
  %v1107 = vpack.c.bf16 %v1105, %v1105
  %1109 = vrot.lane.b32.xlu0 %v1107, 64
  %v1110 = vpop.permute.xlu0 %1109
  %v1112 = vsel %vm140, %v1110, 0
  %1114 = vmatpush.bf16.msra.mxu0 0
  %1115 = vmatpush.bf16.msra.mxu0 0
  %1116 = vmatpush.bf16.msra.mxu0 0
  %1117 = vmatpush.bf16.msra.mxu0 0
  %1118 = vmatpush.bf16.msra.mxu0 0
  %1119 = vmatpush.bf16.msra.mxu0 0
  %1120 = vmatpush.bf16.msra.mxu0 %v757
  %1121 = vmatpush.bf16.msra.mxu0 %v756
  %1122 = vmatmul.bf16.gmra.mxu0 %v1112
  %v1123 = vpop.f32.mrf.mxu0
  %v1124 = vadd.f32 0.0, %v1123
  %v1125 = vpop.f32.mrf.mxu0
  %1126 = vdwg.mxu0
  %v1127 = vadd.f32 %v1106, %v1124
  %v1128 = vxor.u32 %v1127, 2147483648
  %v1129 = vmul.f32 %v1128, 1.442695
  %v1130 = vpow.pop %v1129
  %v1131 = vadd.f32 %v1130, 1.0
  %v1132 = vrcp.pop %v1131
  %v1133 = vmul.f32 %v1131, %v1132
  %v1134 = vsub.f32 1.0, %v1133
  %v1135 = vmul.f32 %v1132, %v1134
  %v1136 = vadd.f32 %v1132, %v1135
  %vm1137 = vweird.f32 %v1131
  %vm1138 = vweird.f32 %v1132
  %vm1139 = vmor %vm1137, %vm1138
  %v1140 = vsel %vm1139, %v1132, %v1136
  %v1141 = vand.u32 2147483647, %v1131
  %vm1142 = vcmp.eq.f32.partialorder %v1141, 8.507059e+37
  %v1143 = vand.u32 %v1131, 2147483648
  %v1144 = vor.u32 1.1754944e-38, %v1143
  %v1145 = vsel %vm1142, %v1144, %v1140
  %v1146 = vmul.f32 1.0, %v1145
  %v1147 = vtanh.pop %v1127
  %v1148 = vmul.f32 %v1146, %v1099
  %1150 = vrot.lane.b32.xlu0 %v1147, 32
  %v1151 = vpop.permute.xlu0 %1150
  %v1153 = vmul.f32 %v1146, %v1151
  %1155 = vrot.lane.b32.xlu0 %v1153, 32
  %v1156 = vpop.permute.xlu0 %1155
  %v1158 = vadd.f32 %v1148, %v1156
  %v1159 = vtanh.pop %v1158
  %1161 = vrot.lane.b32.xlu0 %v1159, 32
  %v1162 = vpop.permute.xlu0 %1161
  %v1164 = vmul.f32 %v1146, %v1162
  %v1165 = vld [vmem:[%s596] sm:$0xff]
  %v1166 = vpack.c.bf16 %v1164, %v1164
  %1168 = vrot.lane.b32.xlu0 %v1166, 64
  %v1169 = vpop.permute.xlu0 %1168
  %v1171 = vsel %vm140, %v1169, 0
  %1173 = vmatpush.bf16.msra.mxu0 0
  %1174 = vmatpush.bf16.msra.mxu0 0
  %1175 = vmatpush.bf16.msra.mxu0 0
  %1176 = vmatpush.bf16.msra.mxu0 0
  %1177 = vmatpush.bf16.msra.mxu0 0
  %1178 = vmatpush.bf16.msra.mxu0 0
  %1179 = vmatpush.bf16.msra.mxu0 %v757
  %1180 = vmatpush.bf16.msra.mxu0 %v756
  %1181 = vmatmul.bf16.gmra.mxu0 %v1171
  %v1182 = vpop.f32.mrf.mxu0
  %v1183 = vadd.f32 0.0, %v1182
  %v1184 = vpop.f32.mrf.mxu0
  %1185 = vdwg.mxu0
  %v1186 = vadd.f32 %v1165, %v1183
  %v1187 = vxor.u32 %v1186, 2147483648
  %v1188 = vmul.f32 %v1187, 1.442695
  %v1189 = vpow.pop %v1188
  %v1190 = vadd.f32 %v1189, 1.0
  %v1191 = vrcp.pop %v1190
  %v1192 = vmul.f32 %v1190, %v1191
  %v1193 = vsub.f32 1.0, %v1192
  %v1194 = vmul.f32 %v1191, %v1193
  %v1195 = vadd.f32 %v1191, %v1194
  %vm1196 = vweird.f32 %v1190
  %vm1197 = vweird.f32 %v1191
  %vm1198 = vmor %vm1196, %vm1197
  %v1199 = vsel %vm1198, %v1191, %v1195
  %v1200 = vand.u32 2147483647, %v1190
  %vm1201 = vcmp.eq.f32.partialorder %v1200, 8.507059e+37
  %v1202 = vand.u32 %v1190, 2147483648
  %v1203 = vor.u32 1.1754944e-38, %v1202
  %v1204 = vsel %vm1201, %v1203, %v1199
  %v1205 = vmul.f32 1.0, %v1204
  %v1206 = vtanh.pop %v1186
  %v1207 = vmul.f32 %v1205, %v1158
  %1209 = vrot.lane.b32.xlu0 %v1206, 32
  %v1210 = vpop.permute.xlu0 %1209
  %v1212 = vmul.f32 %v1205, %v1210
  %1214 = vrot.lane.b32.xlu0 %v1212, 32
  %v1215 = vpop.permute.xlu0 %1214
  %v1217 = vadd.f32 %v1207, %v1215
  %v1218 = vtanh.pop %v1217
  %1220 = vrot.lane.b32.xlu0 %v1218, 32
  %v1221 = vpop.permute.xlu0 %1220
  %v1223 = vmul.f32 %v1205, %v1221
  %v1224 = vpack.c.bf16 %v1223, %v1223
  %v1225 = vld [vmem:[%s7] sm:$0xf]
  %v1226 = vld [vmem:[%s7 + $0x4] sm:$0xf]
  %v1227 = vld [vmem:[%s7 + $0x8] sm:$0xf]
  %v1228 = vld [vmem:[%s7 + $0xc] sm:$0xf]
  %v1229 = vld [vmem:[%s8] sm:$0x1]
  %v1231 = vperm.slane %v1229, 0
  %1234 = vrot.lane.b32.xlu0 %v1224, 64
  %v1235 = vpop.permute.xlu0 %1234
  %v1240 = vunpack.c.l.b16 %v1225
  %v1241 = vunpack.c.l.b16 %v1226
  %v1242 = vunpack.c.l.b16 %v1227
  %v1243 = vunpack.c.l.b16 %v1228
  %v1244 = vpack.c.b16 %v1241, %v1240
  %v1245 = vpack.c.b16 %v1243, %v1242
  %v1249 = vsel %vm140, %v1235, 0
  %1251 = vmatpush.bf16.msra.mxu0 0
  %1252 = vmatpush.bf16.msra.mxu0 0
  %1253 = vmatpush.bf16.msra.mxu0 0
  %1254 = vmatpush.bf16.msra.mxu0 0
  %1255 = vmatpush.bf16.msra.mxu0 0
  %1256 = vmatpush.bf16.msra.mxu0 0
  %1257 = vmatpush.bf16.msra.mxu0 %v1245
  %1258 = vmatpush.bf16.msra.mxu0 %v1244
  %1259 = vmatmul.bf16.gmra.mxu0 %v1249
  %v1260 = vpop.f32.mrf.mxu0
  %v1261 = vadd.f32 %v1231, %v1260
  %v1262 = vpop.f32.mrf.mxu0
  %1263 = vdwg.mxu0
  %vm1264 = vcmask 31744
  %1265 = vst.msk [vmem:[%s9] sm:$0xff] %vm1264, %v1261
  // Predicated region
  $region38: #{lstm_model_forward.1} parent=0 // pred_check
    _
  $region39: #{lstm_model_forward.1} parent=0 // pred_check_branch
    %1267 = sbr.rel (0) target = $region41
  $region40: #{lstm_model_forward.1} parent=0 // pred_region
    _
  $region41: #{lstm_model_forward.1} parent=0 // pred_fallthru
    _
  // Predicated region
  $region42: #{lstm_model_forward.1} parent=0 // pred_check
    _
  $region43: #{lstm_model_forward.1} parent=0 // pred_check_branch
    %1269 = sbr.rel (0) target = $region45
  $region44: #{lstm_model_forward.1} parent=0 // pred_region
    _
  $region45: #{lstm_model_forward.1} parent=0 // pred_fallthru
    _

</llo_original>
